<compile_context>
chip_gen: v5e
topology: v5e:2x2
jax: 0.10.0
libtpu: 0.0.40
codegen_flags: <defaults>
</compile_context>

<pallas_src>
import functools
import jax
import jax.numpy as jnp
from jax import lax
from jax.experimental import pallas as pl
from jax.experimental.pallas import tpu as pltpu


def _row_tile(m, target=512):
    """Largest row tile <= target that divides m (prefer sublane-aligned)."""
    if m <= target:
        return m
    for t in range(target, 0, -1):
        if m % t == 0 and t % 8 == 0:
            return t
    for t in range(target, 0, -1):
        if m % t == 0:
            return t
    return m


# ------------------- k/v projection (sr_ratio == 1 path) -------------------

def _kv_kernel(x_ref, kw_ref, kb_ref, vw_ref, vb_ref, k_ref, v_ref):
    x = x_ref[...]
    k = (jnp.dot(x, kw_ref[...], preferred_element_type=jnp.float32)
         + kb_ref[...].astype(jnp.float32))
    v = (jnp.dot(x, vw_ref[...], preferred_element_type=jnp.float32)
         + vb_ref[...].astype(jnp.float32))
    k_ref[...] = k.astype(k_ref.dtype)
    v_ref[...] = v.astype(v_ref.dtype)


def kv_project(x2d, kw, kb, vw, vb, *, tm_target=512):
    M, C = x2d.shape
    tm = _row_tile(M, tm_target)
    return pl.pallas_call(
        _kv_kernel,
        out_shape=(jax.ShapeDtypeStruct((M, C), x2d.dtype),
                   jax.ShapeDtypeStruct((M, C), x2d.dtype)),
        grid=(M // tm,),
        in_specs=[pl.BlockSpec((tm, C), lambda i: (i, 0)),
                  pl.BlockSpec((C, C), lambda i: (0, 0)),
                  pl.BlockSpec((1, C), lambda i: (0, 0)),
                  pl.BlockSpec((C, C), lambda i: (0, 0)),
                  pl.BlockSpec((1, C), lambda i: (0, 0))],
        out_specs=(pl.BlockSpec((tm, C), lambda i: (i, 0)),
                   pl.BlockSpec((tm, C), lambda i: (i, 0))),
        compiler_params=pltpu.CompilerParams(
            dimension_semantics=("parallel",)),
    )(x2d, kw, kb, vw, vb)


# --------- fused spatial-reduction + LayerNorm + k/v (sr_ratio > 1) ---------

def _sr_ln_kv_kernel(xp_ref, srw_ref, srb_ref, g_ref, b_ref,
                     kw_ref, kb_ref, vw_ref, vb_ref, k_ref, v_ref,
                     *, eps=1e-5):
    # Conv2d(k=s=sr) as patch matmul, then LayerNorm, then k/v projections —
    # all on the same (tm, C) tile, no HBM round trip for the intermediate.
    xp = xp_ref[...]
    x_ = (jnp.dot(xp, srw_ref[...], preferred_element_type=jnp.float32)
          + srb_ref[...].astype(jnp.float32))
    mean = jnp.mean(x_, axis=-1, keepdims=True)
    var = jnp.mean((x_ - mean) ** 2, axis=-1, keepdims=True)
    xn = (x_ - mean) * lax.rsqrt(var + eps)
    xn = xn * g_ref[...].astype(jnp.float32) + b_ref[...].astype(jnp.float32)
    xn = xn.astype(kw_ref.dtype)
    k = (jnp.dot(xn, kw_ref[...], preferred_element_type=jnp.float32)
         + kb_ref[...].astype(jnp.float32))
    v = (jnp.dot(xn, vw_ref[...], preferred_element_type=jnp.float32)
         + vb_ref[...].astype(jnp.float32))
    k_ref[...] = k.astype(k_ref.dtype)
    v_ref[...] = v.astype(v_ref.dtype)


def sr_ln_kv_project(xp, sr_w, sr_b, ln_g, ln_b, kw, kb, vw, vb,
                     *, tm_target=512):
    M, K = xp.shape
    C = sr_w.shape[1]
    tm = _row_tile(M, tm_target)
    return pl.pallas_call(
        _sr_ln_kv_kernel,
        out_shape=(jax.ShapeDtypeStruct((M, C), xp.dtype),
                   jax.ShapeDtypeStruct((M, C), xp.dtype)),
        grid=(M // tm,),
        in_specs=[pl.BlockSpec((tm, K), lambda i: (i, 0)),
                  pl.BlockSpec((K, C), lambda i: (0, 0)),
                  pl.BlockSpec((1, C), lambda i: (0, 0)),
                  pl.BlockSpec((1, C), lambda i: (0, 0)),
                  pl.BlockSpec((1, C), lambda i: (0, 0)),
                  pl.BlockSpec((C, C), lambda i: (0, 0)),
                  pl.BlockSpec((1, C), lambda i: (0, 0)),
                  pl.BlockSpec((C, C), lambda i: (0, 0)),
                  pl.BlockSpec((1, C), lambda i: (0, 0))],
        out_specs=(pl.BlockSpec((tm, C), lambda i: (i, 0)),
                   pl.BlockSpec((tm, C), lambda i: (i, 0))),
        compiler_params=pltpu.CompilerParams(
            dimension_semantics=("parallel",)),
    )(xp, sr_w, sr_b, ln_g, ln_b, kw, kb, vw, vb)


# ----------- fused attention: q-proj + softmax(QK^T)V + out-proj -----------

def _attn_kernel(x_ref, qw_ref, qb_ref, k_ref, v_ref, pw_ref, pb_ref, o_ref,
                 *, num_heads, head_dim):
    # One (batch, query-tile) per grid step.  q projection (scale folded into
    # qw/qb at trace time) and the output projection are fused here; the
    # per-head results are concatenated in-register and written with a single
    # lane-dense (tq, C) store.
    x = x_ref[0]                                   # (tq, C)
    q = (jnp.dot(x, qw_ref[...], preferred_element_type=jnp.float32)
         + qb_ref[...].astype(jnp.float32)).astype(x.dtype)   # (tq, C) scaled
    k = k_ref[0]                                   # (Nk, C)
    v = v_ref[0]                                   # (Nk, C)

    heads = []
    for h in range(num_heads):                     # small static head count
        lo = h * head_dim
        hi = lo + head_dim
        qh = q[:, lo:hi]                           # (tq, Dh)
        kh = k[:, lo:hi]                           # (Nk, Dh)
        vh = v[:, lo:hi]                           # (Nk, Dh)
        # q @ k^T without materializing a transpose: contract the last dims.
        s = lax.dot_general(qh, kh, (((1,), (1,)), ((), ())),
                            preferred_element_type=jnp.float32)   # (tq, Nk)
        s = s - jnp.max(s, axis=-1, keepdims=True)
        p = jnp.exp(s)
        l = jnp.sum(p, axis=-1, keepdims=True)
        oh = jnp.dot(p.astype(vh.dtype), vh,
                     preferred_element_type=jnp.float32)          # (tq, Dh)
        heads.append(oh / l)                       # exact normalize (small tile)

    attn_out = jnp.concatenate(heads, axis=-1)     # (tq, C), lane-dense f32
    # Fused output projection on the assembled tile.
    out = (jnp.dot(attn_out.astype(pw_ref.dtype), pw_ref[...],
                   preferred_element_type=jnp.float32)
           + pb_ref[...].astype(jnp.float32))
    o_ref[0] = out.astype(o_ref.dtype)             # single lane-dense store


def attention_fused(x, qw, qb, k, v, pw, pb, *, num_heads, tq_target=512):
    # x: (B, N, C); k, v: (B, Nk, C); weights resident across the whole grid.
    B, N, C = x.shape
    Nk = k.shape[1]
    head_dim = C // num_heads
    tq = _row_tile(N, tq_target)                   # bounds the (tq, Nk) scores
    kern = functools.partial(_attn_kernel, num_heads=num_heads,
                             head_dim=head_dim)
    return pl.pallas_call(
        kern,
        out_shape=jax.ShapeDtypeStruct((B, N, C), x.dtype),
        grid=(B, N // tq),
        in_specs=[pl.BlockSpec((1, tq, C), lambda b, qi: (b, qi, 0)),
                  pl.BlockSpec((C, C), lambda b, qi: (0, 0)),
                  pl.BlockSpec((1, C), lambda b, qi: (0, 0)),
                  pl.BlockSpec((1, Nk, C), lambda b, qi: (b, 0, 0)),
                  pl.BlockSpec((1, Nk, C), lambda b, qi: (b, 0, 0)),
                  pl.BlockSpec((C, C), lambda b, qi: (0, 0)),
                  pl.BlockSpec((1, C), lambda b, qi: (0, 0))],
        out_specs=pl.BlockSpec((1, tq, C), lambda b, qi: (b, qi, 0)),
        compiler_params=pltpu.CompilerParams(
            dimension_semantics=("parallel", "parallel")),
    )(x, qw, qb, k, v, pw, pb)


# ---------------------------- forward wrapper ----------------------------

def segformer_attention(x, H, W, params, *, num_heads, sr_ratio):
    B, N, C = x.shape

    # Fold the learned attention scale into the q projection (trace-time,
    # O(C^2)); removes the per-(b,h) (N, Nk) elementwise multiply.
    scale = params["scale"][0].astype(params["q_w"].dtype)
    qw = params["q_w"] * scale
    qb = params["q_b"] * scale

    # Split the packed kv projection into separate k / v weights (trace time)
    # so the attention kernel slices k and v without the `dim + lo` offset.
    kw, vw = params["kv_w"][:, :C], params["kv_w"][:, C:]
    kb, vb = params["kv_b"][:, :C], params["kv_b"][:, C:]

    if sr_ratio > 1:
        Hs, Ws = H // sr_ratio, W // sr_ratio
        # NCHW Conv2d(k=s=sr, no pad) == patch-extract + matmul (identical).
        # TODO(synk): patch-extract is an XLA relayout of x; fold into the
        # kernel via an index_map only if profiling shows it visible.
        xp = x.reshape(B, Hs, sr_ratio, Ws, sr_ratio, C)
        xp = xp.transpose(0, 1, 3, 2, 4, 5).reshape(
            B * Hs * Ws, sr_ratio * sr_ratio * C)
        k, v = sr_ln_kv_project(xp, params["sr_w"], params["sr_b"],
                                params["ln_g"], params["ln_b"],
                                kw, kb, vw, vb)
        Nk = Hs * Ws
    else:
        k, v = kv_project(x.reshape(B * N, C), kw, kb, vw, vb)
        Nk = N

    k = k.reshape(B, Nk, C)
    v = v.reshape(B, Nk, C)

    # Fused q-proj + attention + output-proj, lane-dense (B, N, C) output.
    return attention_fused(x, qw, qb, k, v,
                           params["proj_w"], params["proj_b"],
                           num_heads=num_heads)


# ---------------------------- pure-JAX reference ----------------------------

def reference(x, H, W, params, *, num_heads, sr_ratio):
    B, N, C = x.shape
    Dh = C // num_heads
    q = (x.reshape(B * N, C) @ params["q_w"] + params["q_b"]
         ).reshape(B, N, num_heads, Dh).transpose(0, 2, 1, 3)
    if sr_ratio > 1:
        Hs, Ws = H // sr_ratio, W // sr_ratio
        xp = x.reshape(B, Hs, sr_ratio, Ws, sr_ratio, C
                       ).transpose(0, 1, 3, 2, 4, 5
                                   ).reshape(B * Hs * Ws, sr_ratio * sr_ratio * C)
        x_ = xp @ params["sr_w"] + params["sr_b"]
        mean = x_.mean(-1, keepdims=True)
        var = ((x_ - mean) ** 2).mean(-1, keepdims=True)
        x_ = (x_ - mean) / jnp.sqrt(var + 1e-5) * params["ln_g"] + params["ln_b"]
        Nk = Hs * Ws
    else:
        x_ = x.reshape(B * N, C)
        Nk = N
    kv = (x_ @ params["kv_w"] + params["kv_b"]
          ).reshape(B, Nk, 2, num_heads, Dh).transpose(2, 0, 3, 1, 4)
    k, v = kv[0], kv[1]
    attn = jnp.einsum("bhnd,bhkd->bhnk", q, k) * params["scale"][0]
    attn = jax.nn.softmax(attn, axis=-1)
    out = jnp.einsum("bhnk,bhkd->bhnd", attn, v
                     ).transpose(0, 2, 1, 3).reshape(B * N, C)
    out = out @ params["proj_w"] + params["proj_b"]
    return out.reshape(B, N, C)


# ---------------------------- main ----------------------------

if __name__ == "__main__":
    B, H, W = 2, 8, 8
    C, num_heads, sr_ratio = 32, 4, 2
    N = H * W
    head_dim = C // num_heads

    key = jax.random.PRNGKey(0)
    ks = jax.random.split(key, 8)
    std = 0.02
    params = {
        # qkv_bias=False -> zero biases for q / kv
        "q_w":   std * jax.random.normal(ks[0], (C, C), jnp.float32),
        "q_b":   jnp.zeros((1, C), jnp.float32),
        "kv_w":  std * jax.random.normal(ks[1], (C, 2 * C), jnp.float32),
        "kv_b":  jnp.zeros((1, 2 * C), jnp.float32),
        "proj_w": std * jax.random.normal(ks[2], (C, C), jnp.float32),
        "proj_b": jnp.zeros((1, C), jnp.float32),
        # Conv2d(C, C, kernel=sr, stride=sr) flattened as (sr*sr*C, C) matmul
        "sr_w": (2.0 / (sr_ratio * sr_ratio * C)) ** 0.5
                * jax.random.normal(ks[3], (sr_ratio * sr_ratio * C, C), jnp.float32),
        "sr_b": jnp.zeros((1, C), jnp.float32),
        "ln_g": jnp.ones((1, C), jnp.float32),
        "ln_b": jnp.zeros((1, C), jnp.float32),
        # scale = ((qk_scale or head_dim) * 0.5) ** (-0.5)
        "scale": jnp.array([(head_dim * 0.5) ** (-0.5)], jnp.float32),
    }

    x = jax.random.normal(ks[4], (B, N, C), jnp.float32)

    fwd = jax.jit(functools.partial(segformer_attention,
                                    num_heads=num_heads, sr_ratio=sr_ratio),
                  static_argnums=(1, 2))
    out = fwd(x, H, W, params)
    out = jax.block_until_ready(out)

    ref = reference(x, H, W, params, num_heads=num_heads, sr_ratio=sr_ratio)
    assert out.shape == (B, N, C)
    assert jnp.allclose(out, ref, atol=1e-3, rtol=1e-3), \
        f"max abs err {jnp.max(jnp.abs(out - ref))}"

    print("KERNEL_OK")
</pallas_src>

<mosaic_0001>
module attributes {stable_mosaic.version = 11 : i64} {
  func.func @_sr_ln_kv_kernel(%arg0: i32, %arg1: memref<32x128xf32, #tpu.memory_space<vmem>>, %arg2: memref<128x32xf32, #tpu.memory_space<vmem>>, %arg3: memref<1x32xf32, #tpu.memory_space<vmem>>, %arg4: memref<1x32xf32, #tpu.memory_space<vmem>>, %arg5: memref<1x32xf32, #tpu.memory_space<vmem>>, %arg6: memref<32x32xf32, #tpu.memory_space<vmem>>, %arg7: memref<1x32xf32, #tpu.memory_space<vmem>>, %arg8: memref<32x32xf32, #tpu.memory_space<vmem>>, %arg9: memref<1x32xf32, #tpu.memory_space<vmem>>, %arg10: memref<32x32xf32, #tpu.memory_space<vmem>>, %arg11: memref<32x32xf32, #tpu.memory_space<vmem>>) attributes {dimension_semantics = [#tpu.dimension_semantics<parallel>], iteration_bounds = array<i64: 1>, scalar_prefetch = 0 : i64, scratch_operands = 0 : i64, tpu.core_type = #tpu.core_type<tc>, window_params = [{transform_indices = @transform_0, window_bounds = array<i64: 32, 128>}, {pipeline_mode = #tpu.pipeline_mode<synchronous>, transform_indices = @transform_1, window_bounds = array<i64: 128, 32>}, {pipeline_mode = #tpu.pipeline_mode<synchronous>, transform_indices = @transform_2, window_bounds = array<i64: 1, 32>}, {pipeline_mode = #tpu.pipeline_mode<synchronous>, transform_indices = @transform_3, window_bounds = array<i64: 1, 32>}, {pipeline_mode = #tpu.pipeline_mode<synchronous>, transform_indices = @transform_4, window_bounds = array<i64: 1, 32>}, {pipeline_mode = #tpu.pipeline_mode<synchronous>, transform_indices = @transform_5, window_bounds = array<i64: 32, 32>}, {pipeline_mode = #tpu.pipeline_mode<synchronous>, transform_indices = @transform_6, window_bounds = array<i64: 1, 32>}, {pipeline_mode = #tpu.pipeline_mode<synchronous>, transform_indices = @transform_7, window_bounds = array<i64: 32, 32>}, {pipeline_mode = #tpu.pipeline_mode<synchronous>, transform_indices = @transform_8, window_bounds = array<i64: 1, 32>}, {transform_indices = @transform_9, window_bounds = array<i64: 32, 32>}, {transform_indices = @transform_10, window_bounds = array<i64: 32, 32>}]} {
    %c0 = arith.constant 0 : index
    %c0_0 = arith.constant 0 : index
    %0 = vector.load %arg1[%c0, %c0_0] : memref<32x128xf32, #tpu.memory_space<vmem>>, vector<32x128xf32>
    %c0_1 = arith.constant 0 : index
    %c0_2 = arith.constant 0 : index
    %1 = vector.load %arg2[%c0_1, %c0_2] : memref<128x32xf32, #tpu.memory_space<vmem>>, vector<128x32xf32>
    %cst = arith.constant dense<0.000000e+00> : vector<32x32xf32>
    %2 = tpu.matmul %0, %1, %cst {dimension_numbers = #tpu.dot_dimension_numbers<[1], [0], [0], [1], [0, 0, 1, 1], [], []>} : vector<32x128xf32>, vector<128x32xf32>, vector<32x32xf32> -> vector<32x32xf32>
    %c0_3 = arith.constant 0 : index
    %c0_4 = arith.constant 0 : index
    %3 = vector.load %arg3[%c0_3, %c0_4] : memref<1x32xf32, #tpu.memory_space<vmem>>, vector<1x32xf32>
    %4 = vector.broadcast %3 : vector<1x32xf32> to vector<32x32xf32>
    %5 = arith.addf %2, %4 : vector<32x32xf32>
    %cst_5 = arith.constant dense<0.000000e+00> : vector<32xf32>
    %6 = vector.multi_reduction <add>, %5, %cst_5 [1] : vector<32x32xf32> to vector<32xf32>
    %7 = vector.shape_cast %6 : vector<32xf32> to vector<32x1xf32>
    %cst_6 = arith.constant 3.200000e+01 : f32
    %8 = vector.broadcast %cst_6 : f32 to vector<32x1xf32>
    %9 = arith.divf %7, %8 : vector<32x1xf32>
    %10 = vector.broadcast %9 : vector<32x1xf32> to vector<32x32xf32>
    %11 = arith.subf %5, %10 : vector<32x32xf32>
    %12 = arith.mulf %11, %11 : vector<32x32xf32>
    %cst_7 = arith.constant dense<0.000000e+00> : vector<32xf32>
    %13 = vector.multi_reduction <add>, %12, %cst_7 [1] : vector<32x32xf32> to vector<32xf32>
    %14 = vector.shape_cast %13 : vector<32xf32> to vector<32x1xf32>
    %cst_8 = arith.constant 3.200000e+01 : f32
    %15 = vector.broadcast %cst_8 : f32 to vector<32x1xf32>
    %16 = arith.divf %14, %15 : vector<32x1xf32>
    %17 = vector.broadcast %9 : vector<32x1xf32> to vector<32x32xf32>
    %18 = arith.subf %5, %17 : vector<32x32xf32>
    %cst_9 = arith.constant 9.99999974E-6 : f32
    %19 = vector.broadcast %cst_9 : f32 to vector<32x1xf32>
    %20 = arith.addf %16, %19 : vector<32x1xf32>
    %21 = math.rsqrt %20 : vector<32x1xf32>
    %22 = vector.broadcast %21 : vector<32x1xf32> to vector<32x32xf32>
    %23 = arith.mulf %18, %22 : vector<32x32xf32>
    %c0_10 = arith.constant 0 : index
    %c0_11 = arith.constant 0 : index
    %24 = vector.load %arg4[%c0_10, %c0_11] : memref<1x32xf32, #tpu.memory_space<vmem>>, vector<1x32xf32>
    %25 = vector.broadcast %24 : vector<1x32xf32> to vector<32x32xf32>
    %26 = arith.mulf %23, %25 : vector<32x32xf32>
    %c0_12 = arith.constant 0 : index
    %c0_13 = arith.constant 0 : index
    %27 = vector.load %arg5[%c0_12, %c0_13] : memref<1x32xf32, #tpu.memory_space<vmem>>, vector<1x32xf32>
    %28 = vector.broadcast %27 : vector<1x32xf32> to vector<32x32xf32>
    %29 = arith.addf %26, %28 : vector<32x32xf32>
    %c0_14 = arith.constant 0 : index
    %c0_15 = arith.constant 0 : index
    %30 = vector.load %arg6[%c0_14, %c0_15] : memref<32x32xf32, #tpu.memory_space<vmem>>, vector<32x32xf32>
    %cst_16 = arith.constant dense<0.000000e+00> : vector<32x32xf32>
    %31 = tpu.matmul %29, %30, %cst_16 {dimension_numbers = #tpu.dot_dimension_numbers<[1], [0], [0], [1], [0, 0, 1, 1], [], []>} : vector<32x32xf32>, vector<32x32xf32>, vector<32x32xf32> -> vector<32x32xf32>
    %c0_17 = arith.constant 0 : index
    %c0_18 = arith.constant 0 : index
    %32 = vector.load %arg7[%c0_17, %c0_18] : memref<1x32xf32, #tpu.memory_space<vmem>>, vector<1x32xf32>
    %33 = vector.broadcast %32 : vector<1x32xf32> to vector<32x32xf32>
    %34 = arith.addf %31, %33 : vector<32x32xf32>
    %c0_19 = arith.constant 0 : index
    %c0_20 = arith.constant 0 : index
    %35 = vector.load %arg8[%c0_19, %c0_20] : memref<32x32xf32, #tpu.memory_space<vmem>>, vector<32x32xf32>
    %cst_21 = arith.constant dense<0.000000e+00> : vector<32x32xf32>
    %36 = tpu.matmul %29, %35, %cst_21 {dimension_numbers = #tpu.dot_dimension_numbers<[1], [0], [0], [1], [0, 0, 1, 1], [], []>} : vector<32x32xf32>, vector<32x32xf32>, vector<32x32xf32> -> vector<32x32xf32>
    %c0_22 = arith.constant 0 : index
    %c0_23 = arith.constant 0 : index
    %37 = vector.load %arg9[%c0_22, %c0_23] : memref<1x32xf32, #tpu.memory_space<vmem>>, vector<1x32xf32>
    %38 = vector.broadcast %37 : vector<1x32xf32> to vector<32x32xf32>
    %39 = arith.addf %36, %38 : vector<32x32xf32>
    %c0_24 = arith.constant 0 : index
    %c0_25 = arith.constant 0 : index
    %40 = vector.load %arg10[%c0_24, %c0_25] : memref<32x32xf32, #tpu.memory_space<vmem>>, vector<32x32xf32>
    tpu.vector_store %arg10[%c0_24, %c0_25], %34 {strides = array<i32>} : memref<32x32xf32, #tpu.memory_space<vmem>>, vector<32x32xf32>,
    %c0_26 = arith.constant 0 : index
    %c0_27 = arith.constant 0 : index
    %41 = vector.load %arg11[%c0_26, %c0_27] : memref<32x32xf32, #tpu.memory_space<vmem>>, vector<32x32xf32>
    tpu.vector_store %arg11[%c0_26, %c0_27], %39 {strides = array<i32>} : memref<32x32xf32, #tpu.memory_space<vmem>>, vector<32x32xf32>,
    return
  }
  func.func @transform_0(%arg0: i32) -> (i32, i32) {
    %c0_i32 = arith.constant 0 : i32
    %c0_i32_0 = arith.constant 0 : i32
    return %arg0, %c0_i32 : i32, i32
  }
  func.func @transform_1(%arg0: i32) -> (i32, i32) {
    %c0_i32 = arith.constant 0 : i32
    %c0_i32_0 = arith.constant 0 : i32
    %c0_i32_1 = arith.constant 0 : i32
    return %c0_i32, %c0_i32_0 : i32, i32
  }
  func.func @transform_2(%arg0: i32) -> (i32, i32) {
    %c0_i32 = arith.constant 0 : i32
    %c0_i32_0 = arith.constant 0 : i32
    %c0_i32_1 = arith.constant 0 : i32
    return %c0_i32, %c0_i32_0 : i32, i32
  }
  func.func @transform_3(%arg0: i32) -> (i32, i32) {
    %c0_i32 = arith.constant 0 : i32
    %c0_i32_0 = arith.constant 0 : i32
    %c0_i32_1 = arith.constant 0 : i32
    return %c0_i32, %c0_i32_0 : i32, i32
  }
  func.func @transform_4(%arg0: i32) -> (i32, i32) {
    %c0_i32 = arith.constant 0 : i32
    %c0_i32_0 = arith.constant 0 : i32
    %c0_i32_1 = arith.constant 0 : i32
    return %c0_i32, %c0_i32_0 : i32, i32
  }
  func.func @transform_5(%arg0: i32) -> (i32, i32) {
    %c0_i32 = arith.constant 0 : i32
    %c0_i32_0 = arith.constant 0 : i32
    %c0_i32_1 = arith.constant 0 : i32
    return %c0_i32, %c0_i32_0 : i32, i32
  }
  func.func @transform_6(%arg0: i32) -> (i32, i32) {
    %c0_i32 = arith.constant 0 : i32
    %c0_i32_0 = arith.constant 0 : i32
    %c0_i32_1 = arith.constant 0 : i32
    return %c0_i32, %c0_i32_0 : i32, i32
  }
  func.func @transform_7(%arg0: i32) -> (i32, i32) {
    %c0_i32 = arith.constant 0 : i32
    %c0_i32_0 = arith.constant 0 : i32
    %c0_i32_1 = arith.constant 0 : i32
    return %c0_i32, %c0_i32_0 : i32, i32
  }
  func.func @transform_8(%arg0: i32) -> (i32, i32) {
    %c0_i32 = arith.constant 0 : i32
    %c0_i32_0 = arith.constant 0 : i32
    %c0_i32_1 = arith.constant 0 : i32
    return %c0_i32, %c0_i32_0 : i32, i32
  }
  func.func @transform_9(%arg0: i32) -> (i32, i32) {
    %c0_i32 = arith.constant 0 : i32
    %c0_i32_0 = arith.constant 0 : i32
    return %arg0, %c0_i32 : i32, i32
  }
  func.func @transform_10(%arg0: i32) -> (i32, i32) {
    %c0_i32 = arith.constant 0 : i32
    %c0_i32_0 = arith.constant 0 : i32
    return %arg0, %c0_i32 : i32, i32
  }
}

module attributes {stable_mosaic.version = 11 : i64} {
  func.func @_attn_kernel(%arg0: i32, %arg1: i32, %arg2: memref<1x64x32xf32, #tpu.memory_space<vmem>>, %arg3: memref<32x32xf32, #tpu.memory_space<vmem>>, %arg4: memref<1x32xf32, #tpu.memory_space<vmem>>, %arg5: memref<1x16x32xf32, #tpu.memory_space<vmem>>, %arg6: memref<1x16x32xf32, #tpu.memory_space<vmem>>, %arg7: memref<32x32xf32, #tpu.memory_space<vmem>>, %arg8: memref<1x32xf32, #tpu.memory_space<vmem>>, %arg9: memref<1x64x32xf32, #tpu.memory_space<vmem>>) attributes {dimension_semantics = [#tpu.dimension_semantics<parallel>, #tpu.dimension_semantics<parallel>], iteration_bounds = array<i64: 2, 1>, scalar_prefetch = 0 : i64, scratch_operands = 0 : i64, tpu.core_type = #tpu.core_type<tc>, window_params = [{transform_indices = @transform_0, window_bounds = array<i64: 1, 64, 32>}, {pipeline_mode = #tpu.pipeline_mode<synchronous>, transform_indices = @transform_1, window_bounds = array<i64: 32, 32>}, {pipeline_mode = #tpu.pipeline_mode<synchronous>, transform_indices = @transform_2, window_bounds = array<i64: 1, 32>}, {transform_indices = @transform_3, window_bounds = array<i64: 1, 16, 32>}, {transform_indices = @transform_4, window_bounds = array<i64: 1, 16, 32>}, {pipeline_mode = #tpu.pipeline_mode<synchronous>, transform_indices = @transform_5, window_bounds = array<i64: 32, 32>}, {pipeline_mode = #tpu.pipeline_mode<synchronous>, transform_indices = @transform_6, window_bounds = array<i64: 1, 32>}, {transform_indices = @transform_7, window_bounds = array<i64: 1, 64, 32>}]} {
    %c0 = arith.constant 0 : index
    %c0_0 = arith.constant 0 : index
    %c0_1 = arith.constant 0 : index
    %0 = vector.load %arg2[%c0, %c0_0, %c0_1] : memref<1x64x32xf32, #tpu.memory_space<vmem>>, vector<1x64x32xf32>
    %1 = vector.shape_cast %0 : vector<1x64x32xf32> to vector<64x32xf32>
    %c0_2 = arith.constant 0 : index
    %c0_3 = arith.constant 0 : index
    %2 = vector.load %arg3[%c0_2, %c0_3] : memref<32x32xf32, #tpu.memory_space<vmem>>, vector<32x32xf32>
    %cst = arith.constant dense<0.000000e+00> : vector<64x32xf32>
    %3 = tpu.matmul %1, %2, %cst {dimension_numbers = #tpu.dot_dimension_numbers<[1], [0], [0], [1], [0, 0, 1, 1], [], []>} : vector<64x32xf32>, vector<32x32xf32>, vector<64x32xf32> -> vector<64x32xf32>
    %c0_4 = arith.constant 0 : index
    %c0_5 = arith.constant 0 : index
    %4 = vector.load %arg4[%c0_4, %c0_5] : memref<1x32xf32, #tpu.memory_space<vmem>>, vector<1x32xf32>
    %5 = vector.broadcast %4 : vector<1x32xf32> to vector<64x32xf32>
    %6 = arith.addf %3, %5 : vector<64x32xf32>
    %c0_6 = arith.constant 0 : index
    %c0_7 = arith.constant 0 : index
    %c0_8 = arith.constant 0 : index
    %7 = vector.load %arg5[%c0_6, %c0_7, %c0_8] : memref<1x16x32xf32, #tpu.memory_space<vmem>>, vector<1x16x32xf32>
    %8 = vector.shape_cast %7 : vector<1x16x32xf32> to vector<16x32xf32>
    %c0_9 = arith.constant 0 : index
    %c0_10 = arith.constant 0 : index
    %c0_11 = arith.constant 0 : index
    %9 = vector.load %arg6[%c0_9, %c0_10, %c0_11] : memref<1x16x32xf32, #tpu.memory_space<vmem>>, vector<1x16x32xf32>
    %10 = vector.shape_cast %9 : vector<1x16x32xf32> to vector<16x32xf32>
    %11 = vector.extract_strided_slice %6 {offsets = [0, 0], sizes = [64, 8], strides = [1, 1]} : vector<64x32xf32> to vector<64x8xf32>
    %12 = vector.extract_strided_slice %8 {offsets = [0, 0], sizes = [16, 8], strides = [1, 1]} : vector<16x32xf32> to vector<16x8xf32>
    %13 = vector.extract_strided_slice %10 {offsets = [0, 0], sizes = [16, 8], strides = [1, 1]} : vector<16x32xf32> to vector<16x8xf32>
    %cst_12 = arith.constant dense<0.000000e+00> : vector<64x16xf32>
    %14 = tpu.matmul %11, %12, %cst_12 {dimension_numbers = #tpu.dot_dimension_numbers<[1], [1], [0], [0], [0, 0, 1, 0], [], []>} : vector<64x8xf32>, vector<16x8xf32>, vector<64x16xf32> -> vector<64x16xf32>
    %cst_13 = arith.constant dense<0xFF800000> : vector<64xf32>
    %15 = vector.multi_reduction <maximumf>, %14, %cst_13 [1] : vector<64x16xf32> to vector<64xf32>
    %16 = vector.shape_cast %15 : vector<64xf32> to vector<64x1xf32>
    %17 = vector.broadcast %16 : vector<64x1xf32> to vector<64x16xf32>
    %18 = arith.subf %14, %17 : vector<64x16xf32>
    %19 = math.exp %18 : vector<64x16xf32>
    %cst_14 = arith.constant dense<0.000000e+00> : vector<64xf32>
    %20 = vector.multi_reduction <add>, %19, %cst_14 [1] : vector<64x16xf32> to vector<64xf32>
    %21 = vector.shape_cast %20 : vector<64xf32> to vector<64x1xf32>
    %cst_15 = arith.constant dense<0.000000e+00> : vector<64x8xf32>
    %22 = tpu.matmul %19, %13, %cst_15 {dimension_numbers = #tpu.dot_dimension_numbers<[1], [0], [0], [1], [0, 0, 1, 1], [], []>} : vector<64x16xf32>, vector<16x8xf32>, vector<64x8xf32> -> vector<64x8xf32>
    %23 = vector.broadcast %21 : vector<64x1xf32> to vector<64x8xf32>
    %24 = arith.divf %22, %23 : vector<64x8xf32>
    %25 = vector.extract_strided_slice %6 {offsets = [0, 8], sizes = [64, 8], strides = [1, 1]} : vector<64x32xf32> to vector<64x8xf32>
    %26 = vector.extract_strided_slice %8 {offsets = [0, 8], sizes = [16, 8], strides = [1, 1]} : vector<16x32xf32> to vector<16x8xf32>
    %27 = vector.extract_strided_slice %10 {offsets = [0, 8], sizes = [16, 8], strides = [1, 1]} : vector<16x32xf32> to vector<16x8xf32>
    %cst_16 = arith.constant dense<0.000000e+00> : vector<64x16xf32>
    %28 = tpu.matmul %25, %26, %cst_16 {dimension_numbers = #tpu.dot_dimension_numbers<[1], [1], [0], [0], [0, 0, 1, 0], [], []>} : vector<64x8xf32>, vector<16x8xf32>, vector<64x16xf32> -> vector<64x16xf32>
    %cst_17 = arith.constant dense<0xFF800000> : vector<64xf32>
    %29 = vector.multi_reduction <maximumf>, %28, %cst_17 [1] : vector<64x16xf32> to vector<64xf32>
    %30 = vector.shape_cast %29 : vector<64xf32> to vector<64x1xf32>
    %31 = vector.broadcast %30 : vector<64x1xf32> to vector<64x16xf32>
    %32 = arith.subf %28, %31 : vector<64x16xf32>
    %33 = math.exp %32 : vector<64x16xf32>
    %cst_18 = arith.constant dense<0.000000e+00> : vector<64xf32>
    %34 = vector.multi_reduction <add>, %33, %cst_18 [1] : vector<64x16xf32> to vector<64xf32>
    %35 = vector.shape_cast %34 : vector<64xf32> to vector<64x1xf32>
    %cst_19 = arith.constant dense<0.000000e+00> : vector<64x8xf32>
    %36 = tpu.matmul %33, %27, %cst_19 {dimension_numbers = #tpu.dot_dimension_numbers<[1], [0], [0], [1], [0, 0, 1, 1], [], []>} : vector<64x16xf32>, vector<16x8xf32>, vector<64x8xf32> -> vector<64x8xf32>
    %37 = vector.broadcast %35 : vector<64x1xf32> to vector<64x8xf32>
    %38 = arith.divf %36, %37 : vector<64x8xf32>
    %39 = vector.extract_strided_slice %6 {offsets = [0, 16], sizes = [64, 8], strides = [1, 1]} : vector<64x32xf32> to vector<64x8xf32>
    %40 = vector.extract_strided_slice %8 {offsets = [0, 16], sizes = [16, 8], strides = [1, 1]} : vector<16x32xf32> to vector<16x8xf32>
    %41 = vector.extract_strided_slice %10 {offsets = [0, 16], sizes = [16, 8], strides = [1, 1]} : vector<16x32xf32> to vector<16x8xf32>
    %cst_20 = arith.constant dense<0.000000e+00> : vector<64x16xf32>
    %42 = tpu.matmul %39, %40, %cst_20 {dimension_numbers = #tpu.dot_dimension_numbers<[1], [1], [0], [0], [0, 0, 1, 0], [], []>} : vector<64x8xf32>, vector<16x8xf32>, vector<64x16xf32> -> vector<64x16xf32>
    %cst_21 = arith.constant dense<0xFF800000> : vector<64xf32>
    %43 = vector.multi_reduction <maximumf>, %42, %cst_21 [1] : vector<64x16xf32> to vector<64xf32>
    %44 = vector.shape_cast %43 : vector<64xf32> to vector<64x1xf32>
    %45 = vector.broadcast %44 : vector<64x1xf32> to vector<64x16xf32>
    %46 = arith.subf %42, %45 : vector<64x16xf32>
    %47 = math.exp %46 : vector<64x16xf32>
    %cst_22 = arith.constant dense<0.000000e+00> : vector<64xf32>
    %48 = vector.multi_reduction <add>, %47, %cst_22 [1] : vector<64x16xf32> to vector<64xf32>
    %49 = vector.shape_cast %48 : vector<64xf32> to vector<64x1xf32>
    %cst_23 = arith.constant dense<0.000000e+00> : vector<64x8xf32>
    %50 = tpu.matmul %47, %41, %cst_23 {dimension_numbers = #tpu.dot_dimension_numbers<[1], [0], [0], [1], [0, 0, 1, 1], [], []>} : vector<64x16xf32>, vector<16x8xf32>, vector<64x8xf32> -> vector<64x8xf32>
    %51 = vector.broadcast %49 : vector<64x1xf32> to vector<64x8xf32>
    %52 = arith.divf %50, %51 : vector<64x8xf32>
    %53 = vector.extract_strided_slice %6 {offsets = [0, 24], sizes = [64, 8], strides = [1, 1]} : vector<64x32xf32> to vector<64x8xf32>
    %54 = vector.extract_strided_slice %8 {offsets = [0, 24], sizes = [16, 8], strides = [1, 1]} : vector<16x32xf32> to vector<16x8xf32>
    %55 = vector.extract_strided_slice %10 {offsets = [0, 24], sizes = [16, 8], strides = [1, 1]} : vector<16x32xf32> to vector<16x8xf32>
    %cst_24 = arith.constant dense<0.000000e+00> : vector<64x16xf32>
    %56 = tpu.matmul %53, %54, %cst_24 {dimension_numbers = #tpu.dot_dimension_numbers<[1], [1], [0], [0], [0, 0, 1, 0], [], []>} : vector<64x8xf32>, vector<16x8xf32>, vector<64x16xf32> -> vector<64x16xf32>
    %cst_25 = arith.constant dense<0xFF800000> : vector<64xf32>
    %57 = vector.multi_reduction <maximumf>, %56, %cst_25 [1] : vector<64x16xf32> to vector<64xf32>
    %58 = vector.shape_cast %57 : vector<64xf32> to vector<64x1xf32>
    %59 = vector.broadcast %58 : vector<64x1xf32> to vector<64x16xf32>
    %60 = arith.subf %56, %59 : vector<64x16xf32>
    %61 = math.exp %60 : vector<64x16xf32>
    %cst_26 = arith.constant dense<0.000000e+00> : vector<64xf32>
    %62 = vector.multi_reduction <add>, %61, %cst_26 [1] : vector<64x16xf32> to vector<64xf32>
    %63 = vector.shape_cast %62 : vector<64xf32> to vector<64x1xf32>
    %cst_27 = arith.constant dense<0.000000e+00> : vector<64x8xf32>
    %64 = tpu.matmul %61, %55, %cst_27 {dimension_numbers = #tpu.dot_dimension_numbers<[1], [0], [0], [1], [0, 0, 1, 1], [], []>} : vector<64x16xf32>, vector<16x8xf32>, vector<64x8xf32> -> vector<64x8xf32>
    %65 = vector.broadcast %63 : vector<64x1xf32> to vector<64x8xf32>
    %66 = arith.divf %64, %65 : vector<64x8xf32>
    %67 = tpu.concatenate %24, %38, %52, %66 in 1 : vector<64x8xf32>, vector<64x8xf32>, vector<64x8xf32>, vector<64x8xf32> -> vector<64x32xf32>
    %c0_28 = arith.constant 0 : index
    %c0_29 = arith.constant 0 : index
    %68 = vector.load %arg7[%c0_28, %c0_29] : memref<32x32xf32, #tpu.memory_space<vmem>>, vector<32x32xf32>
    %cst_30 = arith.constant dense<0.000000e+00> : vector<64x32xf32>
    %69 = tpu.matmul %67, %68, %cst_30 {dimension_numbers = #tpu.dot_dimension_numbers<[1], [0], [0], [1], [0, 0, 1, 1], [], []>} : vector<64x32xf32>, vector<32x32xf32>, vector<64x32xf32> -> vector<64x32xf32>
    %c0_31 = arith.constant 0 : index
    %c0_32 = arith.constant 0 : index
    %70 = vector.load %arg8[%c0_31, %c0_32] : memref<1x32xf32, #tpu.memory_space<vmem>>, vector<1x32xf32>
    %71 = vector.broadcast %70 : vector<1x32xf32> to vector<64x32xf32>
    %72 = arith.addf %69, %71 : vector<64x32xf32>
    %c0_33 = arith.constant 0 : index
    %c0_34 = arith.constant 0 : index
    %c0_35 = arith.constant 0 : index
    %73 = vector.load %arg9[%c0_33, %c0_34, %c0_35] : memref<1x64x32xf32, #tpu.memory_space<vmem>>, vector<1x64x32xf32>
    %74 = vector.shape_cast %73 : vector<1x64x32xf32> to vector<64x32xf32>
    %75 = vector.shape_cast %72 : vector<64x32xf32> to vector<1x64x32xf32>
    tpu.vector_store %arg9[%c0_33, %c0_34, %c0_35], %75 {strides = array<i32>} : memref<1x64x32xf32, #tpu.memory_space<vmem>>, vector<1x64x32xf32>,
    return
  }
  func.func @transform_0(%arg0: i32, %arg1: i32) -> (i32, i32, i32) {
    %c0_i32 = arith.constant 0 : i32
    %c0_i32_0 = arith.constant 0 : i32
    return %arg0, %arg1, %c0_i32 : i32, i32, i32
  }
  func.func @transform_1(%arg0: i32, %arg1: i32) -> (i32, i32) {
    %c0_i32 = arith.constant 0 : i32
    %c0_i32_0 = arith.constant 0 : i32
    %c0_i32_1 = arith.constant 0 : i32
    return %c0_i32, %c0_i32_0 : i32, i32
  }
  func.func @transform_2(%arg0: i32, %arg1: i32) -> (i32, i32) {
    %c0_i32 = arith.constant 0 : i32
    %c0_i32_0 = arith.constant 0 : i32
    %c0_i32_1 = arith.constant 0 : i32
    return %c0_i32, %c0_i32_0 : i32, i32
  }
  func.func @transform_3(%arg0: i32, %arg1: i32) -> (i32, i32, i32) {
    %c0_i32 = arith.constant 0 : i32
    %c0_i32_0 = arith.constant 0 : i32
    %c0_i32_1 = arith.constant 0 : i32
    return %arg0, %c0_i32, %c0_i32_0 : i32, i32, i32
  }
  func.func @transform_4(%arg0: i32, %arg1: i32) -> (i32, i32, i32) {
    %c0_i32 = arith.constant 0 : i32
    %c0_i32_0 = arith.constant 0 : i32
    %c0_i32_1 = arith.constant 0 : i32
    return %arg0, %c0_i32, %c0_i32_0 : i32, i32, i32
  }
  func.func @transform_5(%arg0: i32, %arg1: i32) -> (i32, i32) {
    %c0_i32 = arith.constant 0 : i32
    %c0_i32_0 = arith.constant 0 : i32
    %c0_i32_1 = arith.constant 0 : i32
    return %c0_i32, %c0_i32_0 : i32, i32
  }
  func.func @transform_6(%arg0: i32, %arg1: i32) -> (i32, i32) {
    %c0_i32 = arith.constant 0 : i32
    %c0_i32_0 = arith.constant 0 : i32
    %c0_i32_1 = arith.constant 0 : i32
    return %c0_i32, %c0_i32_0 : i32, i32
  }
  func.func @transform_7(%arg0: i32, %arg1: i32) -> (i32, i32, i32) {
    %c0_i32 = arith.constant 0 : i32
    %c0_i32_0 = arith.constant 0 : i32
    return %arg0, %arg1, %c0_i32 : i32, i32, i32
  }
}

</mosaic_0001>

<llo_original>
// kernel: segformer_attention.2
$region0: #{segformer_attention.2}
  #allocation0 [shape = 'u32[]', space=smem, size = 0x4, offset = 0x4, fixed_abs, tag = 'smem constant byte address 0x4 - core index']
  #allocation1 [shape = 'u32[72,128]{1,0:T(1,128)}', space=vmem, size = 0x9000, scoped, tag = 'internal scratch']
  %s0 = inlined_call_operand.vmem [shape: f32[32,128], index: 0, kind: input, shape index: {}]
  %s1 = inlined_call_operand.vmem [shape: f32[128,32], index: 1, kind: input, shape index: {}]
  %s2 = inlined_call_operand.vmem [shape: f32[1,32], index: 2, kind: input, shape index: {}]
  %s3 = inlined_call_operand.vmem [shape: f32[1,32], index: 3, kind: input, shape index: {}]
  %s4 = inlined_call_operand.vmem [shape: f32[1,32], index: 4, kind: input, shape index: {}]
  %s5 = inlined_call_operand.vmem [shape: f32[32,32], index: 5, kind: input, shape index: {}]
  %s6 = inlined_call_operand.vmem [shape: f32[1,32], index: 6, kind: input, shape index: {}]
  %s7 = inlined_call_operand.vmem [shape: f32[32,32], index: 7, kind: input, shape index: {}]
  %s8 = inlined_call_operand.vmem [shape: f32[1,32], index: 8, kind: input, shape index: {}]
  %s9 = inlined_call_operand.vmem [shape: f32[32,32], index: 9, kind: output, shape index: {0}]
  %s10 = inlined_call_operand.vmem [shape: f32[32,32], index: 10, kind: output, shape index: {1}]
  %11 = xla_tuple %s9, %s10
  %s12 = sld [smem:[#allocation0]]
  $region54: #{segformer_attention.2} parent=0
    _
  %s14 = ssub.s32 1, %s12
  %s15 = scalar_select 0, %s14, %s12
  // Predicated region
  $region2: #{segformer_attention.2} parent=0 // pred_check
    _
  $region3: #{segformer_attention.2} parent=0 // pred_check_branch
    %17 = sbr.rel (0) target = $region5
  $region4: #{segformer_attention.2} parent=0 // pred_region
    _
  $region5: #{segformer_attention.2} parent=0 // pred_fallthru
    _
  // Predicated region
  $region6: #{segformer_attention.2} parent=0 // pred_check
    _
  $region7: #{segformer_attention.2} parent=0 // pred_check_branch
    %19 = sbr.rel (0) target = $region9
  $region8: #{segformer_attention.2} parent=0 // pred_region
    _
  $region9: #{segformer_attention.2} parent=0 // pred_fallthru
    _
  // Predicated region
  $region10: #{segformer_attention.2} parent=0 // pred_check
    _
  $region11: #{segformer_attention.2} parent=0 // pred_check_branch
    %21 = sbr.rel (0) target = $region13
  $region12: #{segformer_attention.2} parent=0 // pred_region
    _
  $region13: #{segformer_attention.2} parent=0 // pred_fallthru
    _
  // Predicated region
  $region14: #{segformer_attention.2} parent=0 // pred_check
    _
  $region15: #{segformer_attention.2} parent=0 // pred_check_branch
    %23 = sbr.rel (0) target = $region17
  $region16: #{segformer_attention.2} parent=0 // pred_region
    _
  $region17: #{segformer_attention.2} parent=0 // pred_fallthru
    _
  // Predicated region
  $region18: #{segformer_attention.2} parent=0 // pred_check
    _
  $region19: #{segformer_attention.2} parent=0 // pred_check_branch
    %25 = sbr.rel (0) target = $region21
  $region20: #{segformer_attention.2} parent=0 // pred_region
    _
  $region21: #{segformer_attention.2} parent=0 // pred_fallthru
    _
  // Predicated region
  $region22: #{segformer_attention.2} parent=0 // pred_check
    _
  $region23: #{segformer_attention.2} parent=0 // pred_check_branch
    %27 = sbr.rel (0) target = $region25
  $region24: #{segformer_attention.2} parent=0 // pred_region
    _
  $region25: #{segformer_attention.2} parent=0 // pred_fallthru
    _
  // Predicated region
  $region26: #{segformer_attention.2} parent=0 // pred_check
    _
  $region27: #{segformer_attention.2} parent=0 // pred_check_branch
    %29 = sbr.rel (0) target = $region29
  $region28: #{segformer_attention.2} parent=0 // pred_region
    _
  $region29: #{segformer_attention.2} parent=0 // pred_fallthru
    _
  // Predicated region
  $region30: #{segformer_attention.2} parent=0 // pred_check
    _
  $region31: #{segformer_attention.2} parent=0 // pred_check_branch
    %31 = sbr.rel (0) target = $region33
  $region32: #{segformer_attention.2} parent=0 // pred_region
    _
  $region33: #{segformer_attention.2} parent=0 // pred_fallthru
    _
  // Predicated region
  $region34: #{segformer_attention.2} parent=0 // pred_check
    _
  $region35: #{segformer_attention.2} parent=0 // pred_check_branch
    %33 = sbr.rel (0) target = $region37
  $region36: #{segformer_attention.2} parent=0 // pred_region
    _
  $region37: #{segformer_attention.2} parent=0 // pred_fallthru
    _
  %v34 = vld [vmem:[%s0] sm:$0xff]
  %v35 = vld [vmem:[%s0 + $0x8] sm:$0xff]
  %v36 = vld [vmem:[%s0 + $0x10] sm:$0xff]
  %v37 = vld [vmem:[%s0 + $0x18] sm:$0xff]
  %v38 = vld [vmem:[%s1] sm:$0xff]
  %v39 = vld [vmem:[%s1 + $0x8] sm:$0xff]
  %v40 = vld [vmem:[%s1 + $0x10] sm:$0xff]
  %v41 = vld [vmem:[%s1 + $0x18] sm:$0xff]
  %v42 = vld [vmem:[%s1 + $0x20] sm:$0xff]
  %v43 = vld [vmem:[%s1 + $0x28] sm:$0xff]
  %v44 = vld [vmem:[%s1 + $0x30] sm:$0xff]
  %v45 = vld [vmem:[%s1 + $0x38] sm:$0xff]
  %v46 = vld [vmem:[%s1 + $0x40] sm:$0xff]
  %v47 = vld [vmem:[%s1 + $0x48] sm:$0xff]
  %v48 = vld [vmem:[%s1 + $0x50] sm:$0xff]
  %v49 = vld [vmem:[%s1 + $0x58] sm:$0xff]
  %v50 = vld [vmem:[%s1 + $0x60] sm:$0xff]
  %v51 = vld [vmem:[%s1 + $0x68] sm:$0xff]
  %v52 = vld [vmem:[%s1 + $0x70] sm:$0xff]
  %v53 = vld [vmem:[%s1 + $0x78] sm:$0xff]
  %v54 = vld [vmem:[%s2] sm:$0x1]
  %v56 = vperm.slane %v54, 0
  %58 = vmatpush.msra.mxu0 %v53
  %59 = vmatpush.msra.mxu0 %v52
  %60 = vmatpush.msra.mxu0 %v51
  %61 = vmatpush.msra.mxu0 %v50
  %62 = vmatpush.msra.mxu0 %v49
  %63 = vmatpush.msra.mxu0 %v48
  %64 = vmatpush.msra.mxu0 %v47
  %65 = vmatpush.msra.mxu0 %v46
  %66 = vmatpush.msra.mxu0 %v45
  %67 = vmatpush.msra.mxu0 %v44
  %68 = vmatpush.msra.mxu0 %v43
  %69 = vmatpush.msra.mxu0 %v42
  %70 = vmatpush.msra.mxu0 %v41
  %71 = vmatpush.msra.mxu0 %v40
  %72 = vmatpush.msra.mxu0 %v39
  %73 = vmatpush.msra.mxu0 %v38
  %74 = vmatmul.f32.gmra.mxu0 %v34
  %v75 = vpop.f32.mrf.mxu0
  %v76 = vadd.f32 %v56, %v75
  %77 = vmatmul.f32.gmra.mxu0 %v35
  %v78 = vpop.f32.mrf.mxu0
  %v79 = vadd.f32 %v56, %v78
  %80 = vmatmul.f32.gmra.mxu0 %v36
  %v81 = vpop.f32.mrf.mxu0
  %v82 = vadd.f32 %v56, %v81
  %83 = vmatmul.f32.gmra.mxu0 %v37
  %v84 = vpop.f32.mrf.mxu0
  %v85 = vadd.f32 %v56, %v84
  %86 = vdwg.mxu0
  %vm87 = vcmask 261120
  %v88 = vsel %vm87, %v76, 0.0
  %89 = vadd.xlane.f32.xlu0 %v88
  %v90 = vpop.xlane.xlu0 %89
  %v91 = vsel %vm87, %v79, 0.0
  %92 = vadd.xlane.f32.xlu0 %v91
  %v93 = vpop.xlane.xlu0 %92
  %v94 = vsel %vm87, %v82, 0.0
  %95 = vadd.xlane.f32.xlu0 %v94
  %v96 = vpop.xlane.xlu0 %95
  %v97 = vsel %vm87, %v85, 0.0
  %98 = vadd.xlane.f32.xlu0 %v97
  %v99 = vpop.xlane.xlu0 %98
  %v100 = vrcp.pop 32.0
  %v101 = vmul.f32 32.0, %v100
  %v102 = vsub.f32 1.0, %v101
  %v103 = vmul.f32 %v100, %v102
  %v104 = vadd.f32 %v100, %v103
  %vm105 = vweird.f32 %v100
  %v106 = vsel %vm105, %v100, %v104
  %v107 = vmul.f32 %v90, %v106
  %v108 = vmul.f32 %v93, %v106
  %v109 = vmul.f32 %v96, %v106
  %v110 = vmul.f32 %v99, %v106
  %v111 = vsub.f32 %v76, %v107
  %v112 = vsub.f32 %v79, %v108
  %v113 = vsub.f32 %v82, %v109
  %v114 = vsub.f32 %v85, %v110
  %v115 = vmul.f32 %v111, %v111
  %v116 = vmul.f32 %v112, %v112
  %v117 = vmul.f32 %v113, %v113
  %v118 = vmul.f32 %v114, %v114
  %v119 = vsel %vm87, %v115, 0.0
  %120 = vadd.xlane.f32.xlu0 %v119
  %v121 = vpop.xlane.xlu0 %120
  %v122 = vsel %vm87, %v116, 0.0
  %123 = vadd.xlane.f32.xlu0 %v122
  %v124 = vpop.xlane.xlu0 %123
  %v125 = vsel %vm87, %v117, 0.0
  %126 = vadd.xlane.f32.xlu0 %v125
  %v127 = vpop.xlane.xlu0 %126
  %v128 = vsel %vm87, %v118, 0.0
  %129 = vadd.xlane.f32.xlu0 %v128
  %v130 = vpop.xlane.xlu0 %129
  %v131 = vmul.f32 %v121, %v106
  %v132 = vmul.f32 %v124, %v106
  %v133 = vmul.f32 %v127, %v106
  %v134 = vmul.f32 %v130, %v106
  %v135 = vadd.f32 %v131, 1e-05
  %v136 = vadd.f32 %v132, 1e-05
  %v137 = vadd.f32 %v133, 1e-05
  %v138 = vadd.f32 %v134, 1e-05
  %v139 = vrsqrt.pop %v135
  %v140 = vmul.f32 %v139, %v135
  %v141 = vmul.f32 %v140, %v139
  %v142 = vmul.f32 0.5, %v141
  %v143 = vsub.f32 1.5, %v142
  %v144 = vmul.f32 %v139, %v143
  %vm145 = vweird.f32 %v135
  %vm146 = vweird.f32 %v139
  %vm147 = vmor %vm145, %vm146
  %v148 = vsel %vm147, %v139, %v144
  %v149 = vrsqrt.pop %v136
  %v150 = vmul.f32 %v149, %v136
  %v151 = vmul.f32 %v150, %v149
  %v152 = vmul.f32 0.5, %v151
  %v153 = vsub.f32 1.5, %v152
  %v154 = vmul.f32 %v149, %v153
  %vm155 = vweird.f32 %v136
  %vm156 = vweird.f32 %v149
  %vm157 = vmor %vm155, %vm156
  %v158 = vsel %vm157, %v149, %v154
  %v159 = vrsqrt.pop %v137
  %v160 = vmul.f32 %v159, %v137
  %v161 = vmul.f32 %v160, %v159
  %v162 = vmul.f32 0.5, %v161
  %v163 = vsub.f32 1.5, %v162
  %v164 = vmul.f32 %v159, %v163
  %vm165 = vweird.f32 %v137
  %vm166 = vweird.f32 %v159
  %vm167 = vmor %vm165, %vm166
  %v168 = vsel %vm167, %v159, %v164
  %v169 = vrsqrt.pop %v138
  %v170 = vmul.f32 %v169, %v138
  %v171 = vmul.f32 %v170, %v169
  %v172 = vmul.f32 0.5, %v171
  %v173 = vsub.f32 1.5, %v172
  %v174 = vmul.f32 %v169, %v173
  %vm175 = vweird.f32 %v138
  %vm176 = vweird.f32 %v169
  %vm177 = vmor %vm175, %vm176
  %v178 = vsel %vm177, %v169, %v174
  %v179 = vmul.f32 %v111, %v148
  %v180 = vmul.f32 %v112, %v158
  %v181 = vmul.f32 %v113, %v168
  %v182 = vmul.f32 %v114, %v178
  %v183 = vld [vmem:[%s3] sm:$0x1]
  %v185 = vperm.slane %v183, 0
  %v187 = vmul.f32 %v179, %v185
  %v188 = vmul.f32 %v180, %v185
  %v189 = vmul.f32 %v181, %v185
  %v190 = vmul.f32 %v182, %v185
  %v191 = vld [vmem:[%s4] sm:$0x1]
  %v193 = vperm.slane %v191, 0
  %v195 = vadd.f32 %v187, %v193
  %v196 = vadd.f32 %v188, %v193
  %v197 = vadd.f32 %v189, %v193
  %v198 = vadd.f32 %v190, %v193
  %v199 = vld [vmem:[%s5] sm:$0xff]
  %v200 = vld [vmem:[%s5 + $0x8] sm:$0xff]
  %v201 = vld [vmem:[%s5 + $0x10] sm:$0xff]
  %v202 = vld [vmem:[%s5 + $0x18] sm:$0xff]
  %v203 = vld [vmem:[%s6] sm:$0x1]
  %v205 = vperm.slane %v203, 0
  %v208 = vsel %vm87, %v195, 0
  %v211 = vsel %vm87, %v196, 0
  %v214 = vsel %vm87, %v197, 0
  %v217 = vsel %vm87, %v198, 0
  %219 = vmatpush.msra.mxu0 0.0
  %220 = vmatpush.msra.mxu0 0.0
  %221 = vmatpush.msra.mxu0 0.0
  %222 = vmatpush.msra.mxu0 0.0
  %223 = vmatpush.msra.mxu0 0.0
  %224 = vmatpush.msra.mxu0 0.0
  %225 = vmatpush.msra.mxu0 0.0
  %226 = vmatpush.msra.mxu0 0.0
  %227 = vmatpush.msra.mxu0 0.0
  %228 = vmatpush.msra.mxu0 0.0
  %229 = vmatpush.msra.mxu0 0.0
  %230 = vmatpush.msra.mxu0 0.0
  %231 = vmatpush.msra.mxu0 %v202
  %232 = vmatpush.msra.mxu0 %v201
  %233 = vmatpush.msra.mxu0 %v200
  %234 = vmatpush.msra.mxu0 %v199
  %235 = vmatmul.f32.gmra.mxu0 %v208
  %v236 = vpop.f32.mrf.mxu0
  %v237 = vadd.f32 %v205, %v236
  %238 = vmatmul.f32.gmra.mxu0 %v211
  %v239 = vpop.f32.mrf.mxu0
  %v240 = vadd.f32 %v205, %v239
  %241 = vmatmul.f32.gmra.mxu0 %v214
  %v242 = vpop.f32.mrf.mxu0
  %v243 = vadd.f32 %v205, %v242
  %244 = vmatmul.f32.gmra.mxu0 %v217
  %v245 = vpop.f32.mrf.mxu0
  %v246 = vadd.f32 %v205, %v245
  %247 = vdwg.mxu0
  %v248 = vld [vmem:[%s7] sm:$0xff]
  %v249 = vld [vmem:[%s7 + $0x8] sm:$0xff]
  %v250 = vld [vmem:[%s7 + $0x10] sm:$0xff]
  %v251 = vld [vmem:[%s7 + $0x18] sm:$0xff]
  %v252 = vld [vmem:[%s8] sm:$0x1]
  %v254 = vperm.slane %v252, 0
  %256 = vmatpush.msra.mxu0 0.0
  %257 = vmatpush.msra.mxu0 0.0
  %258 = vmatpush.msra.mxu0 0.0
  %259 = vmatpush.msra.mxu0 0.0
  %260 = vmatpush.msra.mxu0 0.0
  %261 = vmatpush.msra.mxu0 0.0
  %262 = vmatpush.msra.mxu0 0.0
  %263 = vmatpush.msra.mxu0 0.0
  %264 = vmatpush.msra.mxu0 0.0
  %265 = vmatpush.msra.mxu0 0.0
  %266 = vmatpush.msra.mxu0 0.0
  %267 = vmatpush.msra.mxu0 0.0
  %268 = vmatpush.msra.mxu0 %v251
  %269 = vmatpush.msra.mxu0 %v250
  %270 = vmatpush.msra.mxu0 %v249
  %271 = vmatpush.msra.mxu0 %v248
  %272 = vmatmul.f32.gmra.mxu0 %v208
  %v273 = vpop.f32.mrf.mxu0
  %v274 = vadd.f32 %v254, %v273
  %275 = vmatmul.f32.gmra.mxu0 %v211
  %v276 = vpop.f32.mrf.mxu0
  %v277 = vadd.f32 %v254, %v276
  %278 = vmatmul.f32.gmra.mxu0 %v214
  %v279 = vpop.f32.mrf.mxu0
  %v280 = vadd.f32 %v254, %v279
  %281 = vmatmul.f32.gmra.mxu0 %v217
  %v282 = vpop.f32.mrf.mxu0
  %v283 = vadd.f32 %v254, %v282
  %284 = vdwg.mxu0
  %285 = vst.msk [vmem:[%s9] sm:$0xff] %vm87, %v237
  %286 = vst.msk [vmem:[%s9 + $0x8] sm:$0xff] %vm87, %v240
  %287 = vst.msk [vmem:[%s9 + $0x10] sm:$0xff] %vm87, %v243
  %288 = vst.msk [vmem:[%s9 + $0x18] sm:$0xff] %vm87, %v246
  %289 = vst.msk [vmem:[%s10] sm:$0xff] %vm87, %v274
  %290 = vst.msk [vmem:[%s10 + $0x8] sm:$0xff] %vm87, %v277
  %291 = vst.msk [vmem:[%s10 + $0x10] sm:$0xff] %vm87, %v280
  %292 = vst.msk [vmem:[%s10 + $0x18] sm:$0xff] %vm87, %v283
  // Predicated region
  $region38: #{segformer_attention.2} parent=0 // pred_check
    _
  $region39: #{segformer_attention.2} parent=0 // pred_check_branch
    %294 = sbr.rel (0) target = $region41
  $region40: #{segformer_attention.2} parent=0 // pred_region
    _
  $region41: #{segformer_attention.2} parent=0 // pred_fallthru
    _
  // Predicated region
  $region42: #{segformer_attention.2} parent=0 // pred_check
    _
  $region43: #{segformer_attention.2} parent=0 // pred_check_branch
    %296 = sbr.rel (0) target = $region45
  $region44: #{segformer_attention.2} parent=0 // pred_region
    _
  $region45: #{segformer_attention.2} parent=0 // pred_fallthru
    _
  // Predicated region
  $region46: #{segformer_attention.2} parent=0 // pred_check
    _
  $region47: #{segformer_attention.2} parent=0 // pred_check_branch
    %298 = sbr.rel (0) target = $region49
  $region48: #{segformer_attention.2} parent=0 // pred_region
    _
  $region49: #{segformer_attention.2} parent=0 // pred_fallthru
    _
  // Predicated region
  $region50: #{segformer_attention.2} parent=0 // pred_check
    _
  $region51: #{segformer_attention.2} parent=0 // pred_check_branch
    %300 = sbr.rel (0) target = $region53
  $region52: #{segformer_attention.2} parent=0 // pred_region
    _
  $region53: #{segformer_attention.2} parent=0 // pred_fallthru
    _

// kernel: segformer_attention.3
$region0: #{segformer_attention.3}
  #allocation0 [shape = 'u32[]', space=smem, size = 0x4, offset = 0x4, fixed_abs, tag = 'smem constant byte address 0x4 - core index']
  #allocation1 [shape = 'u32[72,128]{1,0:T(1,128)}', space=vmem, size = 0x9000, scoped, tag = 'internal scratch']
  %s0 = inlined_call_operand.vmem [shape: f32[2,64,32], index: 0, kind: input, shape index: {}]
  %s1 = inlined_call_operand.vmem [shape: f32[32,32], index: 1, kind: input, shape index: {}]
  %s2 = inlined_call_operand.vmem [shape: f32[1,32], index: 2, kind: input, shape index: {}]
  %s3 = inlined_call_operand.vmem [shape: f32[2,16,32], index: 3, kind: input, shape index: {}]
  %s4 = inlined_call_operand.vmem [shape: f32[2,16,32], index: 4, kind: input, shape index: {}]
  %s5 = inlined_call_operand.vmem [shape: f32[32,32], index: 5, kind: input, shape index: {}]
  %s6 = inlined_call_operand.vmem [shape: f32[1,32], index: 6, kind: input, shape index: {}]
  %s7 = inlined_call_operand.vmem [shape: f32[2,64,32], index: 7, kind: output, shape index: {}]
  %s8 = sld [smem:[#allocation0]]
  $region61: #{segformer_attention.3} parent=0
    _
  %s10 = ssub.s32 1, %s8
  %s11 = scalar_select 0, %s10, %s8
  loop: start=0, step=1, limit=4
  $region2: #{segformer_attention.3} parent=0 // loop_pre_header
    _
  $region3: #{segformer_attention.3} parent=0 // loop_header
    %s13 = sphi 0, %s17
    %p14 = scmp.ge.s32.totalorder %s13, 4
    %s20 = sphi 0, %s32
    %s21 = sphi 0, %s28
    %s22 = sphi 0, %s20
    %s23 = sphi 0, %s21
    %s24 = sphi 0, %s22
    %s25 = sphi 0, %s23
    %s37 = sphi 0, %s39
    %s40 = sphi 0, %s37
    %s41 = sphi 0, %s40
    %s57 = sphi 0, %s41
    %s61 = sphi 0, %s61
    %s63 = sphi 0, %s61
    %s64 = sphi 0, %s63
    %s78 = sphi 0, %s64
    %s82 = sphi 0, %s82
    %s84 = sphi 0, %s82
    %s85 = sphi 0, %s84
    %s99 = sphi 0, %s85
    %s105 = sphi 0, %s107
    %s108 = sphi 0, %s105
    %s109 = sphi 0, %s108
    %s125 = sphi 0, %s109
    %s131 = sphi 0, %s133
    %s134 = sphi 0, %s131
    %s135 = sphi 0, %s134
    %s151 = sphi 0, %s135
    %s155 = sphi 0, %s155
    %s157 = sphi 0, %s155
    %s158 = sphi 0, %s157
    %s172 = sphi 0, %s158
    %s176 = sphi 0, %s176
    %s178 = sphi 0, %s176
    %s179 = sphi 0, %s178
    %s193 = sphi 0, %s179
    %s201 = sphi 0, %s203
    %s204 = sphi 0, %s201
    %s205 = sphi 0, %s204
    %s221 = sphi 0, %s205
  $region4: #{segformer_attention.3} parent=0 // loop_header_branch
    %16 = sbr.rel (%p14) target = $region8
  $region5: #{segformer_attention.3} parent=0 // loop_body
    %s18 = ssub.s32 %s13, 1
    %s19 = ssub.s32 %s13, 2
    %s26 = sadd.s32 1, %s21
    %p27 = scmp.ge.s32.totalorder %s26, 1
    %s28 = scalar_select %p27, 0, %s26
    %s29 = sadd.s32 1, %s20
    %s30 = scalar_select %p27, %s29, %s20
    %p31 = scmp.ge.s32.totalorder %s30, 2
    %s32 = scalar_select %p31, 0, %s30
    %s33 = ssub.s32 %s20, %s32
    %s34 = ssub.s32 %s21, %s28
    %s35 = sor.u32 %s33, %s34
    %p36 = scmp.eq.s32.totalorder %s35, 0
    %s38 = sadd.s32 %s37, 1
    %s39 = scalar_select %p36, %s37, %s38
    %p42 = pneg %p36
    %p43 = scmp.eq.s32.totalorder %s13, 1
    %p44 = por %p42, %p43
    %p45 = scmp.ne.s32.totalorder %s37, %s40
    %p46 = scmp.eq.s32.totalorder %s13, 0
    %p47 = por %p45, %p46
    %p48 = scmp.ne.s32.totalorder %s37, %s40
    %p49 = scmp.eq.s32.totalorder %s18, 1
    %p50 = por %p48, %p49
    %p51 = scmp.ne.s32.totalorder %s40, %s41
    %p52 = scmp.eq.s32.totalorder %s18, 0
    %p53 = por %p51, %p52
    %p54 = scmp.ne.s32.totalorder %s40, %s41
    %p55 = scmp.eq.s32.totalorder %s19, 1
    %p56 = por %p54, %p55
    %p58 = scmp.ne.s32.totalorder %s41, %s57
    %p59 = scmp.eq.s32.totalorder %s19, 0
    %p60 = por %p58, %p59
    %s62 = sadd.s32 %s61, 1
    %p65 = scmp.eq.s32.totalorder %s13, 1
    %p66 = scmp.ne.s32.totalorder %s61, %s63
    %p67 = scmp.eq.s32.totalorder %s13, 0
    %p68 = por %p66, %p67
    %p69 = scmp.ne.s32.totalorder %s61, %s63
    %p70 = scmp.eq.s32.totalorder %s18, 1
    %p71 = por %p69, %p70
    %p72 = scmp.ne.s32.totalorder %s63, %s64
    %p73 = scmp.eq.s32.totalorder %s18, 0
    %p74 = por %p72, %p73
    %p75 = scmp.ne.s32.totalorder %s63, %s64
    %p76 = scmp.eq.s32.totalorder %s19, 1
    %p77 = por %p75, %p76
    %p79 = scmp.ne.s32.totalorder %s64, %s78
    %p80 = scmp.eq.s32.totalorder %s19, 0
    %p81 = por %p79, %p80
    %s83 = sadd.s32 %s82, 1
    %p86 = scmp.eq.s32.totalorder %s13, 1
    %p87 = scmp.ne.s32.totalorder %s82, %s84
    %p88 = scmp.eq.s32.totalorder %s13, 0
    %p89 = por %p87, %p88
    %p90 = scmp.ne.s32.totalorder %s82, %s84
    %p91 = scmp.eq.s32.totalorder %s18, 1
    %p92 = por %p90, %p91
    %p93 = scmp.ne.s32.totalorder %s84, %s85
    %p94 = scmp.eq.s32.totalorder %s18, 0
    %p95 = por %p93, %p94
    %p96 = scmp.ne.s32.totalorder %s84, %s85
    %p97 = scmp.eq.s32.totalorder %s19, 1
    %p98 = por %p96, %p97
    %p100 = scmp.ne.s32.totalorder %s85, %s99
    %p101 = scmp.eq.s32.totalorder %s19, 0
    %p102 = por %p100, %p101
    %s103 = ssub.s32 %s20, %s32
    %p104 = scmp.eq.s32.totalorder %s103, 0
    %s106 = sadd.s32 %s105, 1
    %s107 = scalar_select %p104, %s105, %s106
    %p110 = pneg %p104
    %p111 = scmp.eq.s32.totalorder %s13, 1
    %p112 = por %p110, %p111
    %p113 = scmp.ne.s32.totalorder %s105, %s108
    %p114 = scmp.eq.s32.totalorder %s13, 0
    %p115 = por %p113, %p114
    %p116 = scmp.ne.s32.totalorder %s105, %s108
    %p117 = scmp.eq.s32.totalorder %s18, 1
    %p118 = por %p116, %p117
    %p119 = scmp.ne.s32.totalorder %s108, %s109
    %p120 = scmp.eq.s32.totalorder %s18, 0
    %p121 = por %p119, %p120
    %p122 = scmp.ne.s32.totalorder %s108, %s109
    %p123 = scmp.eq.s32.totalorder %s19, 1
    %p124 = por %p122, %p123
    %p126 = scmp.ne.s32.totalorder %s109, %s125
    %p127 = scmp.eq.s32.totalorder %s19, 0
    %p128 = por %p126, %p127
    %s129 = ssub.s32 %s20, %s32
    %p130 = scmp.eq.s32.totalorder %s129, 0
    %s132 = sadd.s32 %s131, 1
    %s133 = scalar_select %p130, %s131, %s132
    %p136 = pneg %p130
    %p137 = scmp.eq.s32.totalorder %s13, 1
    %p138 = por %p136, %p137
    %p139 = scmp.ne.s32.totalorder %s131, %s134
    %p140 = scmp.eq.s32.totalorder %s13, 0
    %p141 = por %p139, %p140
    %p142 = scmp.ne.s32.totalorder %s131, %s134
    %p143 = scmp.eq.s32.totalorder %s18, 1
    %p144 = por %p142, %p143
    %p145 = scmp.ne.s32.totalorder %s134, %s135
    %p146 = scmp.eq.s32.totalorder %s18, 0
    %p147 = por %p145, %p146
    %p148 = scmp.ne.s32.totalorder %s134, %s135
    %p149 = scmp.eq.s32.totalorder %s19, 1
    %p150 = por %p148, %p149
    %p152 = scmp.ne.s32.totalorder %s135, %s151
    %p153 = scmp.eq.s32.totalorder %s19, 0
    %p154 = por %p152, %p153
    %s156 = sadd.s32 %s155, 1
    %p159 = scmp.eq.s32.totalorder %s13, 1
    %p160 = scmp.ne.s32.totalorder %s155, %s157
    %p161 = scmp.eq.s32.totalorder %s13, 0
    %p162 = por %p160, %p161
    %p163 = scmp.ne.s32.totalorder %s155, %s157
    %p164 = scmp.eq.s32.totalorder %s18, 1
    %p165 = por %p163, %p164
    %p166 = scmp.ne.s32.totalorder %s157, %s158
    %p167 = scmp.eq.s32.totalorder %s18, 0
    %p168 = por %p166, %p167
    %p169 = scmp.ne.s32.totalorder %s157, %s158
    %p170 = scmp.eq.s32.totalorder %s19, 1
    %p171 = por %p169, %p170
    %p173 = scmp.ne.s32.totalorder %s158, %s172
    %p174 = scmp.eq.s32.totalorder %s19, 0
    %p175 = por %p173, %p174
    %s177 = sadd.s32 %s176, 1
    %p180 = scmp.eq.s32.totalorder %s13, 1
    %p181 = scmp.ne.s32.totalorder %s176, %s178
    %p182 = scmp.eq.s32.totalorder %s13, 0
    %p183 = por %p181, %p182
    %p184 = scmp.ne.s32.totalorder %s176, %s178
    %p185 = scmp.eq.s32.totalorder %s18, 1
    %p186 = por %p184, %p185
    %p187 = scmp.ne.s32.totalorder %s178, %s179
    %p188 = scmp.eq.s32.totalorder %s18, 0
    %p189 = por %p187, %p188
    %p190 = scmp.ne.s32.totalorder %s178, %s179
    %p191 = scmp.eq.s32.totalorder %s19, 1
    %p192 = por %p190, %p191
    %p194 = scmp.ne.s32.totalorder %s179, %s193
    %p195 = scmp.eq.s32.totalorder %s19, 0
    %p196 = por %p194, %p195
    %s197 = ssub.s32 %s20, %s32
    %s198 = ssub.s32 %s21, %s28
    %s199 = sor.u32 %s197, %s198
    %p200 = scmp.eq.s32.totalorder %s199, 0
    %s202 = sadd.s32 %s201, 1
    %s203 = scalar_select %p200, %s201, %s202
    %p206 = pneg %p200
    %p207 = scmp.eq.s32.totalorder %s13, 1
    %p208 = por %p206, %p207
    %p209 = scmp.ne.s32.totalorder %s201, %s204
    %p210 = scmp.eq.s32.totalorder %s13, 0
    %p211 = por %p209, %p210
    %p212 = scmp.ne.s32.totalorder %s201, %s204
    %p213 = scmp.eq.s32.totalorder %s18, 1
    %p214 = por %p212, %p213
    %p215 = scmp.ne.s32.totalorder %s204, %s205
    %p216 = scmp.eq.s32.totalorder %s18, 0
    %p217 = por %p215, %p216
    %p218 = scmp.ne.s32.totalorder %s204, %s205
    %p219 = scmp.eq.s32.totalorder %s19, 1
    %p220 = por %p218, %p219
    %p222 = scmp.ne.s32.totalorder %s205, %s221
    %p223 = scmp.eq.s32.totalorder %s19, 0
    %p224 = por %p222, %p223
    %p225 = scmp.le.s32.totalorder 1, %s13
    %p226 = scmp.lt.s32.totalorder %s13, 3
    %p227 = pnand %p225, %p226
    %p228 = pneg %p227
    // Predicated region
    $region9: #{segformer_attention.3} parent=5 // pred_check
      _
    $region10: #{segformer_attention.3} parent=5 // pred_check_branch
      %230 = sbr.rel (%p227) target = $region12
    $region11: #{segformer_attention.3} parent=5 // pred_region
      %s231 = ssub.s32 %s13, 1
      // Predicated region
      $region13: #{segformer_attention.3} parent=11 // pred_check
        %p232 = pneg %p74
      $region14: #{segformer_attention.3} parent=11 // pred_check_branch
        %234 = sbr.rel (%p232) target = $region16
      $region15: #{segformer_attention.3} parent=11 // pred_region
        _
      $region16: #{segformer_attention.3} parent=11 // pred_fallthru
        _
      // Predicated region
      $region17: #{segformer_attention.3} parent=11 // pred_check
        %p235 = pneg %p95
      $region18: #{segformer_attention.3} parent=11 // pred_check_branch
        %237 = sbr.rel (%p235) target = $region20
      $region19: #{segformer_attention.3} parent=11 // pred_region
        _
      $region20: #{segformer_attention.3} parent=11 // pred_fallthru
        _
      // Predicated region
      $region21: #{segformer_attention.3} parent=11 // pred_check
        %p238 = pneg %p168
      $region22: #{segformer_attention.3} parent=11 // pred_check_branch
        %240 = sbr.rel (%p238) target = $region24
      $region23: #{segformer_attention.3} parent=11 // pred_region
        _
      $region24: #{segformer_attention.3} parent=11 // pred_fallthru
        _
      // Predicated region
      $region25: #{segformer_attention.3} parent=11 // pred_check
        %p241 = pneg %p189
      $region26: #{segformer_attention.3} parent=11 // pred_check_branch
        %243 = sbr.rel (%p241) target = $region28
      $region27: #{segformer_attention.3} parent=11 // pred_region
        _
      $region28: #{segformer_attention.3} parent=11 // pred_fallthru
        _
    $region12: #{segformer_attention.3} parent=5 // pred_fallthru
      _
    %p244 = scmp.lt.s32.totalorder %s13, 2
    // Predicated region
    $region29: #{segformer_attention.3} parent=5 // pred_check
      %p245 = pneg %p244
    $region30: #{segformer_attention.3} parent=5 // pred_check_branch
      %247 = sbr.rel (%p245) target = $region32
    $region31: #{segformer_attention.3} parent=5 // pred_region
      // Predicated region
      $region33: #{segformer_attention.3} parent=31 // pred_check
        %p248 = pneg %p47
      $region34: #{segformer_attention.3} parent=31 // pred_check_branch
        %250 = sbr.rel (%p248) target = $region36
      $region35: #{segformer_attention.3} parent=31 // pred_region
        %s251 = smul.u32 8, %s21
        %p252 = scmp.lt.s32.totalorder %s20, 1
        %s253 = scalar_select %p252, %s20, 1
        %p254 = scmp.lt.s32.totalorder %s251, 7
        %s255 = scalar_select %p254, %s251, 7
        %s256 = smul.addr %s253, 8
        %s257 = sadd.s32 %s255, %s256
        %s258 = smul.addr %s257, 8
        %s259 = scalar_lea.vmem %s0, %s258
        %s260 = smul.u32 8, %s21
      $region36: #{segformer_attention.3} parent=31 // pred_fallthru
        _
      // Predicated region
      $region37: #{segformer_attention.3} parent=31 // pred_check
        %p261 = pneg %p115
      $region38: #{segformer_attention.3} parent=31 // pred_check_branch
        %263 = sbr.rel (%p261) target = $region40
      $region39: #{segformer_attention.3} parent=31 // pred_region
        %p264 = scmp.lt.s32.totalorder %s20, 1
        %s265 = scalar_select %p264, %s20, 1
        %s266 = smul.addr %s265, 2
        %s267 = smul.addr %s266, 8
        %s268 = scalar_lea.vmem %s3, %s267
      $region40: #{segformer_attention.3} parent=31 // pred_fallthru
        _
      // Predicated region
      $region41: #{segformer_attention.3} parent=31 // pred_check
        %p269 = pneg %p141
      $region42: #{segformer_attention.3} parent=31 // pred_check_branch
        %271 = sbr.rel (%p269) target = $region44
      $region43: #{segformer_attention.3} parent=31 // pred_region
        %p272 = scmp.lt.s32.totalorder %s20, 1
        %s273 = scalar_select %p272, %s20, 1
        %s274 = smul.addr %s273, 2
        %s275 = smul.addr %s274, 8
        %s276 = scalar_lea.vmem %s4, %s275
      $region44: #{segformer_attention.3} parent=31 // pred_fallthru
        _
    $region32: #{segformer_attention.3} parent=5 // pred_fallthru
      _
    %p277 = scmp.le.s32.totalorder 1, %s13
    %p278 = scmp.lt.s32.totalorder %s13, 3
    %p279 = pnand %p277, %p278
    %p280 = pneg %p279
    // Predicated region
    $region45: #{segformer_attention.3} parent=5 // pred_check
      _
    $region46: #{segformer_attention.3} parent=5 // pred_check_branch
      %282 = sbr.rel (%p279) target = $region48
    $region47: #{segformer_attention.3} parent=5 // pred_region
      %s283 = ssub.s32 %s13, 1
      %s284 = smul.u32 8, %s23
      %p285 = scmp.lt.s32.totalorder %s22, 1
      %s286 = scalar_select %p285, %s22, 1
      %p287 = scmp.lt.s32.totalorder %s284, 7
      %s288 = scalar_select %p287, %s284, 7
      %s289 = smul.addr %s286, 8
      %s290 = sadd.s32 %s288, %s289
      %s291 = smul.addr %s290, 8
      %s292 = scalar_lea.vmem %s0, %s291
      %p293 = pneg %p53
      %p294 = pneg %p50
      %p295 = pneg %p74
      %p296 = pneg %p71
      %p297 = pneg %p95
      %p298 = pneg %p92
      %p299 = scmp.lt.s32.totalorder %s22, 1
      %s300 = scalar_select %p299, %s22, 1
      %s301 = smul.addr %s300, 2
      %s302 = smul.addr %s301, 8
      %s303 = scalar_lea.vmem %s3, %s302
      %p304 = pneg %p121
      %p305 = pneg %p118
      %p306 = scmp.lt.s32.totalorder %s22, 1
      %s307 = scalar_select %p306, %s22, 1
      %s308 = smul.addr %s307, 2
      %s309 = smul.addr %s308, 8
      %s310 = scalar_lea.vmem %s4, %s309
      %p311 = pneg %p147
      %p312 = pneg %p144
      %p313 = pneg %p168
      %p314 = pneg %p165
      %p315 = pneg %p189
      %p316 = pneg %p186
      %p317 = pneg %p217
      %p318 = pneg %p214
      %s319 = smul.u32 8, %s23
      %p320 = scmp.lt.s32.totalorder %s22, 1
      %s321 = scalar_select %p320, %s22, 1
      %p322 = scmp.lt.s32.totalorder %s319, 7
      %s323 = scalar_select %p322, %s319, 7
      %s324 = smul.addr %s321, 8
      %s325 = sadd.s32 %s323, %s324
      %s326 = smul.addr %s325, 8
      %s327 = scalar_lea.vmem %s7, %s326
      %s328 = smul.u32 8, %s23
      %p329 = scmp.lt.s32.totalorder %s22, 1
      %s330 = scalar_select %p329, %s22, 1
      %p331 = scmp.lt.s32.totalorder %s328, 7
      %s332 = scalar_select %p331, %s328, 7
      %s333 = smul.addr %s330, 8
      %s334 = sadd.s32 %s332, %s333
      %s335 = smul.addr %s334, 8
      %s336 = scalar_lea.vmem %s0, %s335
      %s337 = smul.u32 8, %s23
      %p338 = scmp.lt.s32.totalorder %s22, 1
      %s339 = scalar_select %p338, %s22, 1
      %s340 = smul.addr %s339, 2
      %s341 = smul.addr %s340, 8
      %s342 = scalar_lea.vmem %s3, %s341
      %p343 = scmp.lt.s32.totalorder %s22, 1
      %s344 = scalar_select %p343, %s22, 1
      %s345 = smul.addr %s344, 2
      %s346 = smul.addr %s345, 8
      %s347 = scalar_lea.vmem %s4, %s346
      %s348 = smul.u32 8, %s23
      %p349 = scmp.lt.s32.totalorder %s22, 1
      %s350 = scalar_select %p349, %s22, 1
      %p351 = scmp.lt.s32.totalorder %s348, 7
      %s352 = scalar_select %p351, %s348, 7
      %s353 = smul.addr %s350, 8
      %s354 = sadd.s32 %s352, %s353
      %s355 = smul.addr %s354, 8
      %s356 = scalar_lea.vmem %s7, %s355
      %s357 = smul.u32 8, %s23
      %v358 = vld [vmem:[%s336] sm:$0xff]
      %v359 = vld [vmem:[%s336 + $0x8] sm:$0xff]
      %v360 = vld [vmem:[%s336 + $0x10] sm:$0xff]
      %v361 = vld [vmem:[%s336 + $0x18] sm:$0xff]
      %v362 = vld [vmem:[%s336 + $0x20] sm:$0xff]
      %v363 = vld [vmem:[%s336 + $0x28] sm:$0xff]
      %v364 = vld [vmem:[%s336 + $0x30] sm:$0xff]
      %v365 = vld [vmem:[%s336 + $0x38] sm:$0xff]
      %v366 = vld [vmem:[%s1] sm:$0xff]
      %v367 = vld [vmem:[%s1 + $0x8] sm:$0xff]
      %v368 = vld [vmem:[%s1 + $0x10] sm:$0xff]
      %v369 = vld [vmem:[%s1 + $0x18] sm:$0xff]
      %v370 = vld [vmem:[%s2] sm:$0x1]
      %v372 = vperm.slane %v370, 0
      %vm374 = vcmask 261120
      %v376 = vsel %vm374, %v358, 0
      %v379 = vsel %vm374, %v359, 0
      %v382 = vsel %vm374, %v360, 0
      %v385 = vsel %vm374, %v361, 0
      %v388 = vsel %vm374, %v362, 0
      %v391 = vsel %vm374, %v363, 0
      %v394 = vsel %vm374, %v364, 0
      %v397 = vsel %vm374, %v365, 0
      %399 = vmatpush.msra.mxu0 0.0
      %400 = vmatpush.msra.mxu0 0.0
      %401 = vmatpush.msra.mxu0 0.0
      %402 = vmatpush.msra.mxu0 0.0
      %403 = vmatpush.msra.mxu0 0.0
      %404 = vmatpush.msra.mxu0 0.0
      %405 = vmatpush.msra.mxu0 0.0
      %406 = vmatpush.msra.mxu0 0.0
      %407 = vmatpush.msra.mxu0 0.0
      %408 = vmatpush.msra.mxu0 0.0
      %409 = vmatpush.msra.mxu0 0.0
      %410 = vmatpush.msra.mxu0 0.0
      %411 = vmatpush.msra.mxu0 %v369
      %412 = vmatpush.msra.mxu0 %v368
      %413 = vmatpush.msra.mxu0 %v367
      %414 = vmatpush.msra.mxu0 %v366
      %415 = vmatmul.f32.gmra.mxu0 %v376
      %v416 = vpop.f32.mrf.mxu0
      %v417 = vadd.f32 %v372, %v416
      %418 = vmatmul.f32.gmra.mxu0 %v379
      %v419 = vpop.f32.mrf.mxu0
      %v420 = vadd.f32 %v372, %v419
      %421 = vmatmul.f32.gmra.mxu0 %v382
      %v422 = vpop.f32.mrf.mxu0
      %v423 = vadd.f32 %v372, %v422
      %424 = vmatmul.f32.gmra.mxu0 %v385
      %v425 = vpop.f32.mrf.mxu0
      %v426 = vadd.f32 %v372, %v425
      %427 = vmatmul.f32.gmra.mxu0 %v388
      %v428 = vpop.f32.mrf.mxu0
      %v429 = vadd.f32 %v372, %v428
      %430 = vmatmul.f32.gmra.mxu0 %v391
      %v431 = vpop.f32.mrf.mxu0
      %v432 = vadd.f32 %v372, %v431
      %433 = vmatmul.f32.gmra.mxu0 %v394
      %v434 = vpop.f32.mrf.mxu0
      %v435 = vadd.f32 %v372, %v434
      %436 = vmatmul.f32.gmra.mxu0 %v397
      %v437 = vpop.f32.mrf.mxu0
      %v438 = vadd.f32 %v372, %v437
      %439 = vdwg.mxu0
      %v440 = vld [vmem:[%s342] sm:$0xff]
      %v441 = vld [vmem:[%s342 + $0x8] sm:$0xff]
      %v442 = vld [vmem:[%s347] sm:$0xff]
      %v443 = vld [vmem:[%s347 + $0x8] sm:$0xff]
      %vm444 = vcmask 64512
      %v446 = vsel %vm444, %v417, 0
      %v449 = vsel %vm444, %v420, 0
      %v452 = vsel %vm444, %v423, 0
      %v455 = vsel %vm444, %v426, 0
      %v458 = vsel %vm444, %v429, 0
      %v461 = vsel %vm444, %v432, 0
      %v464 = vsel %vm444, %v435, 0
      %v467 = vsel %vm444, %v438, 0
      %v470 = vsel %vm444, %v440, 0
      %v473 = vsel %vm444, %v441, 0
      %475 = vmatpush.xpose.msra.mxu0 0.0
      %476 = vmatpush.xpose.msra.mxu0 0.0
      %477 = vmatpush.xpose.msra.mxu0 0.0
      %478 = vmatpush.xpose.msra.mxu0 0.0
      %479 = vmatpush.xpose.msra.mxu0 0.0
      %480 = vmatpush.xpose.msra.mxu0 0.0
      %481 = vmatpush.xpose.msra.mxu0 0.0
      %482 = vmatpush.xpose.msra.mxu0 0.0
      %483 = vmatpush.xpose.msra.mxu0 0.0
      %484 = vmatpush.xpose.msra.mxu0 0.0
      %485 = vmatpush.xpose.msra.mxu0 0.0
      %486 = vmatpush.xpose.msra.mxu0 0.0
      %487 = vmatpush.xpose.msra.mxu0 0.0
      %488 = vmatpush.xpose.msra.mxu0 0.0
      %489 = vmatpush.xpose.msra.mxu0 %v473
      %490 = vmatpush.xpose.msra.mxu0 %v470
      %491 = vmatmul.f32.gmra.mxu0 %v446
      %v492 = vpop.f32.mrf.mxu0
      %v493 = vadd.f32 0.0, %v492
      %494 = vmatmul.f32.gmra.mxu0 %v449
      %v495 = vpop.f32.mrf.mxu0
      %v496 = vadd.f32 0.0, %v495
      %497 = vmatmul.f32.gmra.mxu0 %v452
      %v498 = vpop.f32.mrf.mxu0
      %v499 = vadd.f32 0.0, %v498
      %500 = vmatmul.f32.gmra.mxu0 %v455
      %v501 = vpop.f32.mrf.mxu0
      %v502 = vadd.f32 0.0, %v501
      %503 = vmatmul.f32.gmra.mxu0 %v458
      %v504 = vpop.f32.mrf.mxu0
      %v505 = vadd.f32 0.0, %v504
      %506 = vmatmul.f32.gmra.mxu0 %v461
      %v507 = vpop.f32.mrf.mxu0
      %v508 = vadd.f32 0.0, %v507
      %509 = vmatmul.f32.gmra.mxu0 %v464
      %v510 = vpop.f32.mrf.mxu0
      %v511 = vadd.f32 0.0, %v510
      %512 = vmatmul.f32.gmra.mxu0 %v467
      %v513 = vpop.f32.mrf.mxu0
      %v514 = vadd.f32 0.0, %v513
      %515 = vdwg.mxu0
      %vm516 = vcmask 130048
      %v517 = vsel %vm516, %v493, -inf
      %518 = vmax.xlane.f32.xlu0 %v517
      %v519 = vpop.xlane.xlu0 %518
      %v520 = vsel %vm516, %v496, -inf
      %521 = vmax.xlane.f32.xlu0 %v520
      %v522 = vpop.xlane.xlu0 %521
      %v523 = vsel %vm516, %v499, -inf
      %524 = vmax.xlane.f32.xlu0 %v523
      %v525 = vpop.xlane.xlu0 %524
      %v526 = vsel %vm516, %v502, -inf
      %527 = vmax.xlane.f32.xlu0 %v526
      %v528 = vpop.xlane.xlu0 %527
      %v529 = vsel %vm516, %v505, -inf
      %530 = vmax.xlane.f32.xlu0 %v529
      %v531 = vpop.xlane.xlu0 %530
      %v532 = vsel %vm516, %v508, -inf
      %533 = vmax.xlane.f32.xlu0 %v532
      %v534 = vpop.xlane.xlu0 %533
      %v535 = vsel %vm516, %v511, -inf
      %536 = vmax.xlane.f32.xlu0 %v535
      %v537 = vpop.xlane.xlu0 %536
      %v538 = vsel %vm516, %v514, -inf
      %539 = vmax.xlane.f32.xlu0 %v538
      %v540 = vpop.xlane.xlu0 %539
      %v541 = vsub.f32 %v493, %v519
      %v542 = vsub.f32 %v496, %v522
      %v543 = vsub.f32 %v499, %v525
      %v544 = vsub.f32 %v502, %v528
      %v545 = vsub.f32 %v505, %v531
      %v546 = vsub.f32 %v508, %v534
      %v547 = vsub.f32 %v511, %v537
      %v548 = vsub.f32 %v514, %v540
      %v549 = vmul.f32 %v541, 1.442695
      %v550 = vpow.pop %v549
      %v551 = vmul.f32 %v542, 1.442695
      %v552 = vpow.pop %v551
      %v553 = vmul.f32 %v543, 1.442695
      %v554 = vpow.pop %v553
      %v555 = vmul.f32 %v544, 1.442695
      %v556 = vpow.pop %v555
      %v557 = vmul.f32 %v545, 1.442695
      %v558 = vpow.pop %v557
      %v559 = vmul.f32 %v546, 1.442695
      %v560 = vpow.pop %v559
      %v561 = vmul.f32 %v547, 1.442695
      %v562 = vpow.pop %v561
      %v563 = vmul.f32 %v548, 1.442695
      %v564 = vpow.pop %v563
      %v565 = vsel %vm516, %v550, 0.0
      %566 = vadd.xlane.f32.xlu0 %v565
      %v567 = vpop.xlane.xlu0 %566
      %v568 = vsel %vm516, %v552, 0.0
      %569 = vadd.xlane.f32.xlu0 %v568
      %v570 = vpop.xlane.xlu0 %569
      %v571 = vsel %vm516, %v554, 0.0
      %572 = vadd.xlane.f32.xlu0 %v571
      %v573 = vpop.xlane.xlu0 %572
      %v574 = vsel %vm516, %v556, 0.0
      %575 = vadd.xlane.f32.xlu0 %v574
      %v576 = vpop.xlane.xlu0 %575
      %v577 = vsel %vm516, %v558, 0.0
      %578 = vadd.xlane.f32.xlu0 %v577
      %v579 = vpop.xlane.xlu0 %578
      %v580 = vsel %vm516, %v560, 0.0
      %581 = vadd.xlane.f32.xlu0 %v580
      %v582 = vpop.xlane.xlu0 %581
      %v583 = vsel %vm516, %v562, 0.0
      %584 = vadd.xlane.f32.xlu0 %v583
      %v585 = vpop.xlane.xlu0 %584
      %v586 = vsel %vm516, %v564, 0.0
      %587 = vadd.xlane.f32.xlu0 %v586
      %v588 = vpop.xlane.xlu0 %587
      %v590 = vsel %vm516, %v550, 0
      %v593 = vsel %vm516, %v552, 0
      %v596 = vsel %vm516, %v554, 0
      %v599 = vsel %vm516, %v556, 0
      %v602 = vsel %vm516, %v558, 0
      %v605 = vsel %vm516, %v560, 0
      %v608 = vsel %vm516, %v562, 0
      %v611 = vsel %vm516, %v564, 0
      %613 = vmatpush.msra.mxu0 0.0
      %614 = vmatpush.msra.mxu0 0.0
      %615 = vmatpush.msra.mxu0 0.0
      %616 = vmatpush.msra.mxu0 0.0
      %617 = vmatpush.msra.mxu0 0.0
      %618 = vmatpush.msra.mxu0 0.0
      %619 = vmatpush.msra.mxu0 0.0
      %620 = vmatpush.msra.mxu0 0.0
      %621 = vmatpush.msra.mxu0 0.0
      %622 = vmatpush.msra.mxu0 0.0
      %623 = vmatpush.msra.mxu0 0.0
      %624 = vmatpush.msra.mxu0 0.0
      %625 = vmatpush.msra.mxu0 0.0
      %626 = vmatpush.msra.mxu0 0.0
      %627 = vmatpush.msra.mxu0 %v443
      %628 = vmatpush.msra.mxu0 %v442
      %629 = vmatmul.f32.gmra.mxu0 %v590
      %v630 = vpop.f32.mrf.mxu0
      %v631 = vadd.f32 0.0, %v630
      %632 = vmatmul.f32.gmra.mxu0 %v593
      %v633 = vpop.f32.mrf.mxu0
      %v634 = vadd.f32 0.0, %v633
      %635 = vmatmul.f32.gmra.mxu0 %v596
      %v636 = vpop.f32.mrf.mxu0
      %v637 = vadd.f32 0.0, %v636
      %638 = vmatmul.f32.gmra.mxu0 %v599
      %v639 = vpop.f32.mrf.mxu0
      %v640 = vadd.f32 0.0, %v639
      %641 = vmatmul.f32.gmra.mxu0 %v602
      %v642 = vpop.f32.mrf.mxu0
      %v643 = vadd.f32 0.0, %v642
      %644 = vmatmul.f32.gmra.mxu0 %v605
      %v645 = vpop.f32.mrf.mxu0
      %v646 = vadd.f32 0.0, %v645
      %647 = vmatmul.f32.gmra.mxu0 %v608
      %v648 = vpop.f32.mrf.mxu0
      %v649 = vadd.f32 0.0, %v648
      %650 = vmatmul.f32.gmra.mxu0 %v611
      %v651 = vpop.f32.mrf.mxu0
      %v652 = vadd.f32 0.0, %v651
      %653 = vdwg.mxu0
      %v654 = vrcp.pop %v567
      %v655 = vmul.f32 %v567, %v654
      %v656 = vsub.f32 1.0, %v655
      %v657 = vmul.f32 %v654, %v656
      %v658 = vadd.f32 %v654, %v657
      %vm659 = vweird.f32 %v567
      %vm660 = vweird.f32 %v654
      %vm661 = vmor %vm659, %vm660
      %v662 = vsel %vm661, %v654, %v658
      %v663 = vand.u32 2147483647, %v567
      %vm664 = vcmp.eq.f32.partialorder %v663, 8.507059e+37
      %v665 = vand.u32 %v567, 2147483648
      %v666 = vor.u32 1.1754944e-38, %v665
      %v667 = vsel %vm664, %v666, %v662
      %v668 = vmul.f32 %v631, %v667
      %v669 = vrcp.pop %v570
      %v670 = vmul.f32 %v570, %v669
      %v671 = vsub.f32 1.0, %v670
      %v672 = vmul.f32 %v669, %v671
      %v673 = vadd.f32 %v669, %v672
      %vm674 = vweird.f32 %v570
      %vm675 = vweird.f32 %v669
      %vm676 = vmor %vm674, %vm675
      %v677 = vsel %vm676, %v669, %v673
      %v678 = vand.u32 2147483647, %v570
      %vm679 = vcmp.eq.f32.partialorder %v678, 8.507059e+37
      %v680 = vand.u32 %v570, 2147483648
      %v681 = vor.u32 1.1754944e-38, %v680
      %v682 = vsel %vm679, %v681, %v677
      %v683 = vmul.f32 %v634, %v682
      %v684 = vrcp.pop %v573
      %v685 = vmul.f32 %v573, %v684
      %v686 = vsub.f32 1.0, %v685
      %v687 = vmul.f32 %v684, %v686
      %v688 = vadd.f32 %v684, %v687
      %vm689 = vweird.f32 %v573
      %vm690 = vweird.f32 %v684
      %vm691 = vmor %vm689, %vm690
      %v692 = vsel %vm691, %v684, %v688
      %v693 = vand.u32 2147483647, %v573
      %vm694 = vcmp.eq.f32.partialorder %v693, 8.507059e+37
      %v695 = vand.u32 %v573, 2147483648
      %v696 = vor.u32 1.1754944e-38, %v695
      %v697 = vsel %vm694, %v696, %v692
      %v698 = vmul.f32 %v637, %v697
      %v699 = vrcp.pop %v576
      %v700 = vmul.f32 %v576, %v699
      %v701 = vsub.f32 1.0, %v700
      %v702 = vmul.f32 %v699, %v701
      %v703 = vadd.f32 %v699, %v702
      %vm704 = vweird.f32 %v576
      %vm705 = vweird.f32 %v699
      %vm706 = vmor %vm704, %vm705
      %v707 = vsel %vm706, %v699, %v703
      %v708 = vand.u32 2147483647, %v576
      %vm709 = vcmp.eq.f32.partialorder %v708, 8.507059e+37
      %v710 = vand.u32 %v576, 2147483648
      %v711 = vor.u32 1.1754944e-38, %v710
      %v712 = vsel %vm709, %v711, %v707
      %v713 = vmul.f32 %v640, %v712
      %v714 = vrcp.pop %v579
      %v715 = vmul.f32 %v579, %v714
      %v716 = vsub.f32 1.0, %v715
      %v717 = vmul.f32 %v714, %v716
      %v718 = vadd.f32 %v714, %v717
      %vm719 = vweird.f32 %v579
      %vm720 = vweird.f32 %v714
      %vm721 = vmor %vm719, %vm720
      %v722 = vsel %vm721, %v714, %v718
      %v723 = vand.u32 2147483647, %v579
      %vm724 = vcmp.eq.f32.partialorder %v723, 8.507059e+37
      %v725 = vand.u32 %v579, 2147483648
      %v726 = vor.u32 1.1754944e-38, %v725
      %v727 = vsel %vm724, %v726, %v722
      %v728 = vmul.f32 %v643, %v727
      %v729 = vrcp.pop %v582
      %v730 = vmul.f32 %v582, %v729
      %v731 = vsub.f32 1.0, %v730
      %v732 = vmul.f32 %v729, %v731
      %v733 = vadd.f32 %v729, %v732
      %vm734 = vweird.f32 %v582
      %vm735 = vweird.f32 %v729
      %vm736 = vmor %vm734, %vm735
      %v737 = vsel %vm736, %v729, %v733
      %v738 = vand.u32 2147483647, %v582
      %vm739 = vcmp.eq.f32.partialorder %v738, 8.507059e+37
      %v740 = vand.u32 %v582, 2147483648
      %v741 = vor.u32 1.1754944e-38, %v740
      %v742 = vsel %vm739, %v741, %v737
      %v743 = vmul.f32 %v646, %v742
      %v744 = vrcp.pop %v585
      %v745 = vmul.f32 %v585, %v744
      %v746 = vsub.f32 1.0, %v745
      %v747 = vmul.f32 %v744, %v746
      %v748 = vadd.f32 %v744, %v747
      %vm749 = vweird.f32 %v585
      %vm750 = vweird.f32 %v744
      %vm751 = vmor %vm749, %vm750
      %v752 = vsel %vm751, %v744, %v748
      %v753 = vand.u32 2147483647, %v585
      %vm754 = vcmp.eq.f32.partialorder %v753, 8.507059e+37
      %v755 = vand.u32 %v585, 2147483648
      %v756 = vor.u32 1.1754944e-38, %v755
      %v757 = vsel %vm754, %v756, %v752
      %v758 = vmul.f32 %v649, %v757
      %v759 = vrcp.pop %v588
      %v760 = vmul.f32 %v588, %v759
      %v761 = vsub.f32 1.0, %v760
      %v762 = vmul.f32 %v759, %v761
      %v763 = vadd.f32 %v759, %v762
      %vm764 = vweird.f32 %v588
      %vm765 = vweird.f32 %v759
      %vm766 = vmor %vm764, %vm765
      %v767 = vsel %vm766, %v759, %v763
      %v768 = vand.u32 2147483647, %v588
      %vm769 = vcmp.eq.f32.partialorder %v768, 8.507059e+37
      %v770 = vand.u32 %v588, 2147483648
      %v771 = vor.u32 1.1754944e-38, %v770
      %v772 = vsel %vm769, %v771, %v767
      %v773 = vmul.f32 %v652, %v772
      %774 = vrot.lane.b32.xlu0 %v417, 120
      %v775 = vpop.permute.xlu0 %774
      %776 = vrot.lane.b32.xlu0 %v420, 120
      %v777 = vpop.permute.xlu0 %776
      %778 = vrot.lane.b32.xlu0 %v423, 120
      %v779 = vpop.permute.xlu0 %778
      %780 = vrot.lane.b32.xlu0 %v426, 120
      %v781 = vpop.permute.xlu0 %780
      %782 = vrot.lane.b32.xlu0 %v429, 120
      %v783 = vpop.permute.xlu0 %782
      %784 = vrot.lane.b32.xlu0 %v432, 120
      %v785 = vpop.permute.xlu0 %784
      %786 = vrot.lane.b32.xlu0 %v435, 120
      %v787 = vpop.permute.xlu0 %786
      %788 = vrot.lane.b32.xlu0 %v438, 120
      %v789 = vpop.permute.xlu0 %788
      %790 = vrot.lane.b32.xlu0 %v440, 120
      %v791 = vpop.permute.xlu0 %790
      %792 = vrot.lane.b32.xlu0 %v441, 120
      %v793 = vpop.permute.xlu0 %792
      %v794 = vsel %vm444, %v775, 0
      %v796 = vsel %vm444, %v777, 0
      %v798 = vsel %vm444, %v779, 0
      %v800 = vsel %vm444, %v781, 0
      %v802 = vsel %vm444, %v783, 0
      %v804 = vsel %vm444, %v785, 0
      %v806 = vsel %vm444, %v787, 0
      %v808 = vsel %vm444, %v789, 0
      %v810 = vsel %vm444, %v791, 0
      %v812 = vsel %vm444, %v793, 0
      %814 = vmatpush.xpose.msra.mxu0 0.0
      %815 = vmatpush.xpose.msra.mxu0 0.0
      %816 = vmatpush.xpose.msra.mxu0 0.0
      %817 = vmatpush.xpose.msra.mxu0 0.0
      %818 = vmatpush.xpose.msra.mxu0 0.0
      %819 = vmatpush.xpose.msra.mxu0 0.0
      %820 = vmatpush.xpose.msra.mxu0 0.0
      %821 = vmatpush.xpose.msra.mxu0 0.0
      %822 = vmatpush.xpose.msra.mxu0 0.0
      %823 = vmatpush.xpose.msra.mxu0 0.0
      %824 = vmatpush.xpose.msra.mxu0 0.0
      %825 = vmatpush.xpose.msra.mxu0 0.0
      %826 = vmatpush.xpose.msra.mxu0 0.0
      %827 = vmatpush.xpose.msra.mxu0 0.0
      %828 = vmatpush.xpose.msra.mxu0 %v812
      %829 = vmatpush.xpose.msra.mxu0 %v810
      %830 = vmatmul.f32.gmra.mxu0 %v794
      %v831 = vpop.f32.mrf.mxu0
      %v832 = vadd.f32 0.0, %v831
      %833 = vmatmul.f32.gmra.mxu0 %v796
      %v834 = vpop.f32.mrf.mxu0
      %v835 = vadd.f32 0.0, %v834
      %836 = vmatmul.f32.gmra.mxu0 %v798
      %v837 = vpop.f32.mrf.mxu0
      %v838 = vadd.f32 0.0, %v837
      %839 = vmatmul.f32.gmra.mxu0 %v800
      %v840 = vpop.f32.mrf.mxu0
      %v841 = vadd.f32 0.0, %v840
      %842 = vmatmul.f32.gmra.mxu0 %v802
      %v843 = vpop.f32.mrf.mxu0
      %v844 = vadd.f32 0.0, %v843
      %845 = vmatmul.f32.gmra.mxu0 %v804
      %v846 = vpop.f32.mrf.mxu0
      %v847 = vadd.f32 0.0, %v846
      %848 = vmatmul.f32.gmra.mxu0 %v806
      %v849 = vpop.f32.mrf.mxu0
      %v850 = vadd.f32 0.0, %v849
      %851 = vmatmul.f32.gmra.mxu0 %v808
      %v852 = vpop.f32.mrf.mxu0
      %v853 = vadd.f32 0.0, %v852
      %854 = vdwg.mxu0
      %v855 = vsel %vm516, %v832, -inf
      %856 = vmax.xlane.f32.xlu0 %v855
      %v857 = vpop.xlane.xlu0 %856
      %v858 = vsel %vm516, %v835, -inf
      %859 = vmax.xlane.f32.xlu0 %v858
      %v860 = vpop.xlane.xlu0 %859
      %v861 = vsel %vm516, %v838, -inf
      %862 = vmax.xlane.f32.xlu0 %v861
      %v863 = vpop.xlane.xlu0 %862
      %v864 = vsel %vm516, %v841, -inf
      %865 = vmax.xlane.f32.xlu0 %v864
      %v866 = vpop.xlane.xlu0 %865
      %v867 = vsel %vm516, %v844, -inf
      %868 = vmax.xlane.f32.xlu0 %v867
      %v869 = vpop.xlane.xlu0 %868
      %v870 = vsel %vm516, %v847, -inf
      %871 = vmax.xlane.f32.xlu0 %v870
      %v872 = vpop.xlane.xlu0 %871
      %v873 = vsel %vm516, %v850, -inf
      %874 = vmax.xlane.f32.xlu0 %v873
      %v875 = vpop.xlane.xlu0 %874
      %v876 = vsel %vm516, %v853, -inf
      %877 = vmax.xlane.f32.xlu0 %v876
      %v878 = vpop.xlane.xlu0 %877
      %v879 = vsub.f32 %v832, %v857
      %v880 = vsub.f32 %v835, %v860
      %v881 = vsub.f32 %v838, %v863
      %v882 = vsub.f32 %v841, %v866
      %v883 = vsub.f32 %v844, %v869
      %v884 = vsub.f32 %v847, %v872
      %v885 = vsub.f32 %v850, %v875
      %v886 = vsub.f32 %v853, %v878
      %v887 = vmul.f32 %v879, 1.442695
      %v888 = vpow.pop %v887
      %v889 = vmul.f32 %v880, 1.442695
      %v890 = vpow.pop %v889
      %v891 = vmul.f32 %v881, 1.442695
      %v892 = vpow.pop %v891
      %v893 = vmul.f32 %v882, 1.442695
      %v894 = vpow.pop %v893
      %v895 = vmul.f32 %v883, 1.442695
      %v896 = vpow.pop %v895
      %v897 = vmul.f32 %v884, 1.442695
      %v898 = vpow.pop %v897
      %v899 = vmul.f32 %v885, 1.442695
      %v900 = vpow.pop %v899
      %v901 = vmul.f32 %v886, 1.442695
      %v902 = vpow.pop %v901
      %v903 = vsel %vm516, %v888, 0.0
      %904 = vadd.xlane.f32.xlu0 %v903
      %v905 = vpop.xlane.xlu0 %904
      %v906 = vsel %vm516, %v890, 0.0
      %907 = vadd.xlane.f32.xlu0 %v906
      %v908 = vpop.xlane.xlu0 %907
      %v909 = vsel %vm516, %v892, 0.0
      %910 = vadd.xlane.f32.xlu0 %v909
      %v911 = vpop.xlane.xlu0 %910
      %v912 = vsel %vm516, %v894, 0.0
      %913 = vadd.xlane.f32.xlu0 %v912
      %v914 = vpop.xlane.xlu0 %913
      %v915 = vsel %vm516, %v896, 0.0
      %916 = vadd.xlane.f32.xlu0 %v915
      %v917 = vpop.xlane.xlu0 %916
      %v918 = vsel %vm516, %v898, 0.0
      %919 = vadd.xlane.f32.xlu0 %v918
      %v920 = vpop.xlane.xlu0 %919
      %v921 = vsel %vm516, %v900, 0.0
      %922 = vadd.xlane.f32.xlu0 %v921
      %v923 = vpop.xlane.xlu0 %922
      %v924 = vsel %vm516, %v902, 0.0
      %925 = vadd.xlane.f32.xlu0 %v924
      %v926 = vpop.xlane.xlu0 %925
      %929 = vrot.lane.b32.xlu0 %v442, 120
      %v930 = vpop.permute.xlu0 %929
      %931 = vrot.lane.b32.xlu0 %v443, 120
      %v932 = vpop.permute.xlu0 %931
      %v936 = vsel %vm516, %v888, 0
      %v939 = vsel %vm516, %v890, 0
      %v942 = vsel %vm516, %v892, 0
      %v945 = vsel %vm516, %v894, 0
      %v948 = vsel %vm516, %v896, 0
      %v951 = vsel %vm516, %v898, 0
      %v954 = vsel %vm516, %v900, 0
      %v957 = vsel %vm516, %v902, 0
      %959 = vmatpush.msra.mxu0 0.0
      %960 = vmatpush.msra.mxu0 0.0
      %961 = vmatpush.msra.mxu0 0.0
      %962 = vmatpush.msra.mxu0 0.0
      %963 = vmatpush.msra.mxu0 0.0
      %964 = vmatpush.msra.mxu0 0.0
      %965 = vmatpush.msra.mxu0 0.0
      %966 = vmatpush.msra.mxu0 0.0
      %967 = vmatpush.msra.mxu0 0.0
      %968 = vmatpush.msra.mxu0 0.0
      %969 = vmatpush.msra.mxu0 0.0
      %970 = vmatpush.msra.mxu0 0.0
      %971 = vmatpush.msra.mxu0 0.0
      %972 = vmatpush.msra.mxu0 0.0
      %973 = vmatpush.msra.mxu0 %v932
      %974 = vmatpush.msra.mxu0 %v930
      %975 = vmatmul.f32.gmra.mxu0 %v936
      %v976 = vpop.f32.mrf.mxu0
      %v977 = vadd.f32 0.0, %v976
      %978 = vmatmul.f32.gmra.mxu0 %v939
      %v979 = vpop.f32.mrf.mxu0
      %v980 = vadd.f32 0.0, %v979
      %981 = vmatmul.f32.gmra.mxu0 %v942
      %v982 = vpop.f32.mrf.mxu0
      %v983 = vadd.f32 0.0, %v982
      %984 = vmatmul.f32.gmra.mxu0 %v945
      %v985 = vpop.f32.mrf.mxu0
      %v986 = vadd.f32 0.0, %v985
      %987 = vmatmul.f32.gmra.mxu0 %v948
      %v988 = vpop.f32.mrf.mxu0
      %v989 = vadd.f32 0.0, %v988
      %990 = vmatmul.f32.gmra.mxu0 %v951
      %v991 = vpop.f32.mrf.mxu0
      %v992 = vadd.f32 0.0, %v991
      %993 = vmatmul.f32.gmra.mxu0 %v954
      %v994 = vpop.f32.mrf.mxu0
      %v995 = vadd.f32 0.0, %v994
      %996 = vmatmul.f32.gmra.mxu0 %v957
      %v997 = vpop.f32.mrf.mxu0
      %v998 = vadd.f32 0.0, %v997
      %999 = vdwg.mxu0
      %v1000 = vrcp.pop %v905
      %v1001 = vmul.f32 %v905, %v1000
      %v1002 = vsub.f32 1.0, %v1001
      %v1003 = vmul.f32 %v1000, %v1002
      %v1004 = vadd.f32 %v1000, %v1003
      %vm1005 = vweird.f32 %v905
      %vm1006 = vweird.f32 %v1000
      %vm1007 = vmor %vm1005, %vm1006
      %v1008 = vsel %vm1007, %v1000, %v1004
      %v1009 = vand.u32 2147483647, %v905
      %vm1010 = vcmp.eq.f32.partialorder %v1009, 8.507059e+37
      %v1011 = vand.u32 %v905, 2147483648
      %v1012 = vor.u32 1.1754944e-38, %v1011
      %v1013 = vsel %vm1010, %v1012, %v1008
      %v1014 = vmul.f32 %v977, %v1013
      %v1015 = vrcp.pop %v908
      %v1016 = vmul.f32 %v908, %v1015
      %v1017 = vsub.f32 1.0, %v1016
      %v1018 = vmul.f32 %v1015, %v1017
      %v1019 = vadd.f32 %v1015, %v1018
      %vm1020 = vweird.f32 %v908
      %vm1021 = vweird.f32 %v1015
      %vm1022 = vmor %vm1020, %vm1021
      %v1023 = vsel %vm1022, %v1015, %v1019
      %v1024 = vand.u32 2147483647, %v908
      %vm1025 = vcmp.eq.f32.partialorder %v1024, 8.507059e+37
      %v1026 = vand.u32 %v908, 2147483648
      %v1027 = vor.u32 1.1754944e-38, %v1026
      %v1028 = vsel %vm1025, %v1027, %v1023
      %v1029 = vmul.f32 %v980, %v1028
      %v1030 = vrcp.pop %v911
      %v1031 = vmul.f32 %v911, %v1030
      %v1032 = vsub.f32 1.0, %v1031
      %v1033 = vmul.f32 %v1030, %v1032
      %v1034 = vadd.f32 %v1030, %v1033
      %vm1035 = vweird.f32 %v911
      %vm1036 = vweird.f32 %v1030
      %vm1037 = vmor %vm1035, %vm1036
      %v1038 = vsel %vm1037, %v1030, %v1034
      %v1039 = vand.u32 2147483647, %v911
      %vm1040 = vcmp.eq.f32.partialorder %v1039, 8.507059e+37
      %v1041 = vand.u32 %v911, 2147483648
      %v1042 = vor.u32 1.1754944e-38, %v1041
      %v1043 = vsel %vm1040, %v1042, %v1038
      %v1044 = vmul.f32 %v983, %v1043
      %v1045 = vrcp.pop %v914
      %v1046 = vmul.f32 %v914, %v1045
      %v1047 = vsub.f32 1.0, %v1046
      %v1048 = vmul.f32 %v1045, %v1047
      %v1049 = vadd.f32 %v1045, %v1048
      %vm1050 = vweird.f32 %v914
      %vm1051 = vweird.f32 %v1045
      %vm1052 = vmor %vm1050, %vm1051
      %v1053 = vsel %vm1052, %v1045, %v1049
      %v1054 = vand.u32 2147483647, %v914
      %vm1055 = vcmp.eq.f32.partialorder %v1054, 8.507059e+37
      %v1056 = vand.u32 %v914, 2147483648
      %v1057 = vor.u32 1.1754944e-38, %v1056
      %v1058 = vsel %vm1055, %v1057, %v1053
      %v1059 = vmul.f32 %v986, %v1058
      %v1060 = vrcp.pop %v917
      %v1061 = vmul.f32 %v917, %v1060
      %v1062 = vsub.f32 1.0, %v1061
      %v1063 = vmul.f32 %v1060, %v1062
      %v1064 = vadd.f32 %v1060, %v1063
      %vm1065 = vweird.f32 %v917
      %vm1066 = vweird.f32 %v1060
      %vm1067 = vmor %vm1065, %vm1066
      %v1068 = vsel %vm1067, %v1060, %v1064
      %v1069 = vand.u32 2147483647, %v917
      %vm1070 = vcmp.eq.f32.partialorder %v1069, 8.507059e+37
      %v1071 = vand.u32 %v917, 2147483648
      %v1072 = vor.u32 1.1754944e-38, %v1071
      %v1073 = vsel %vm1070, %v1072, %v1068
      %v1074 = vmul.f32 %v989, %v1073
      %v1075 = vrcp.pop %v920
      %v1076 = vmul.f32 %v920, %v1075
      %v1077 = vsub.f32 1.0, %v1076
      %v1078 = vmul.f32 %v1075, %v1077
      %v1079 = vadd.f32 %v1075, %v1078
      %vm1080 = vweird.f32 %v920
      %vm1081 = vweird.f32 %v1075
      %vm1082 = vmor %vm1080, %vm1081
      %v1083 = vsel %vm1082, %v1075, %v1079
      %v1084 = vand.u32 2147483647, %v920
      %vm1085 = vcmp.eq.f32.partialorder %v1084, 8.507059e+37
      %v1086 = vand.u32 %v920, 2147483648
      %v1087 = vor.u32 1.1754944e-38, %v1086
      %v1088 = vsel %vm1085, %v1087, %v1083
      %v1089 = vmul.f32 %v992, %v1088
      %v1090 = vrcp.pop %v923
      %v1091 = vmul.f32 %v923, %v1090
      %v1092 = vsub.f32 1.0, %v1091
      %v1093 = vmul.f32 %v1090, %v1092
      %v1094 = vadd.f32 %v1090, %v1093
      %vm1095 = vweird.f32 %v923
      %vm1096 = vweird.f32 %v1090
      %vm1097 = vmor %vm1095, %vm1096
      %v1098 = vsel %vm1097, %v1090, %v1094
      %v1099 = vand.u32 2147483647, %v923
      %vm1100 = vcmp.eq.f32.partialorder %v1099, 8.507059e+37
      %v1101 = vand.u32 %v923, 2147483648
      %v1102 = vor.u32 1.1754944e-38, %v1101
      %v1103 = vsel %vm1100, %v1102, %v1098
      %v1104 = vmul.f32 %v995, %v1103
      %v1105 = vrcp.pop %v926
      %v1106 = vmul.f32 %v926, %v1105
      %v1107 = vsub.f32 1.0, %v1106
      %v1108 = vmul.f32 %v1105, %v1107
      %v1109 = vadd.f32 %v1105, %v1108
      %vm1110 = vweird.f32 %v926
      %vm1111 = vweird.f32 %v1105
      %vm1112 = vmor %vm1110, %vm1111
      %v1113 = vsel %vm1112, %v1105, %v1109
      %v1114 = vand.u32 2147483647, %v926
      %vm1115 = vcmp.eq.f32.partialorder %v1114, 8.507059e+37
      %v1116 = vand.u32 %v926, 2147483648
      %v1117 = vor.u32 1.1754944e-38, %v1116
      %v1118 = vsel %vm1115, %v1117, %v1113
      %v1119 = vmul.f32 %v998, %v1118
      %1120 = vrot.lane.b32.xlu0 %v417, 112
      %v1121 = vpop.permute.xlu0 %1120
      %1122 = vrot.lane.b32.xlu0 %v420, 112
      %v1123 = vpop.permute.xlu0 %1122
      %1124 = vrot.lane.b32.xlu0 %v423, 112
      %v1125 = vpop.permute.xlu0 %1124
      %1126 = vrot.lane.b32.xlu0 %v426, 112
      %v1127 = vpop.permute.xlu0 %1126
      %1128 = vrot.lane.b32.xlu0 %v429, 112
      %v1129 = vpop.permute.xlu0 %1128
      %1130 = vrot.lane.b32.xlu0 %v432, 112
      %v1131 = vpop.permute.xlu0 %1130
      %1132 = vrot.lane.b32.xlu0 %v435, 112
      %v1133 = vpop.permute.xlu0 %1132
      %1134 = vrot.lane.b32.xlu0 %v438, 112
      %v1135 = vpop.permute.xlu0 %1134
      %1136 = vrot.lane.b32.xlu0 %v440, 112
      %v1137 = vpop.permute.xlu0 %1136
      %1138 = vrot.lane.b32.xlu0 %v441, 112
      %v1139 = vpop.permute.xlu0 %1138
      %v1140 = vsel %vm444, %v1121, 0
      %v1142 = vsel %vm444, %v1123, 0
      %v1144 = vsel %vm444, %v1125, 0
      %v1146 = vsel %vm444, %v1127, 0
      %v1148 = vsel %vm444, %v1129, 0
      %v1150 = vsel %vm444, %v1131, 0
      %v1152 = vsel %vm444, %v1133, 0
      %v1154 = vsel %vm444, %v1135, 0
      %v1156 = vsel %vm444, %v1137, 0
      %v1158 = vsel %vm444, %v1139, 0
      %1160 = vmatpush.xpose.msra.mxu0 0.0
      %1161 = vmatpush.xpose.msra.mxu0 0.0
      %1162 = vmatpush.xpose.msra.mxu0 0.0
      %1163 = vmatpush.xpose.msra.mxu0 0.0
      %1164 = vmatpush.xpose.msra.mxu0 0.0
      %1165 = vmatpush.xpose.msra.mxu0 0.0
      %1166 = vmatpush.xpose.msra.mxu0 0.0
      %1167 = vmatpush.xpose.msra.mxu0 0.0
      %1168 = vmatpush.xpose.msra.mxu0 0.0
      %1169 = vmatpush.xpose.msra.mxu0 0.0
      %1170 = vmatpush.xpose.msra.mxu0 0.0
      %1171 = vmatpush.xpose.msra.mxu0 0.0
      %1172 = vmatpush.xpose.msra.mxu0 0.0
      %1173 = vmatpush.xpose.msra.mxu0 0.0
      %1174 = vmatpush.xpose.msra.mxu0 %v1158
      %1175 = vmatpush.xpose.msra.mxu0 %v1156
      %1176 = vmatmul.f32.gmra.mxu0 %v1140
      %v1177 = vpop.f32.mrf.mxu0
      %v1178 = vadd.f32 0.0, %v1177
      %1179 = vmatmul.f32.gmra.mxu0 %v1142
      %v1180 = vpop.f32.mrf.mxu0
      %v1181 = vadd.f32 0.0, %v1180
      %1182 = vmatmul.f32.gmra.mxu0 %v1144
      %v1183 = vpop.f32.mrf.mxu0
      %v1184 = vadd.f32 0.0, %v1183
      %1185 = vmatmul.f32.gmra.mxu0 %v1146
      %v1186 = vpop.f32.mrf.mxu0
      %v1187 = vadd.f32 0.0, %v1186
      %1188 = vmatmul.f32.gmra.mxu0 %v1148
      %v1189 = vpop.f32.mrf.mxu0
      %v1190 = vadd.f32 0.0, %v1189
      %1191 = vmatmul.f32.gmra.mxu0 %v1150
      %v1192 = vpop.f32.mrf.mxu0
      %v1193 = vadd.f32 0.0, %v1192
      %1194 = vmatmul.f32.gmra.mxu0 %v1152
      %v1195 = vpop.f32.mrf.mxu0
      %v1196 = vadd.f32 0.0, %v1195
      %1197 = vmatmul.f32.gmra.mxu0 %v1154
      %v1198 = vpop.f32.mrf.mxu0
      %v1199 = vadd.f32 0.0, %v1198
      %1200 = vdwg.mxu0
      %v1201 = vsel %vm516, %v1178, -inf
      %1202 = vmax.xlane.f32.xlu0 %v1201
      %v1203 = vpop.xlane.xlu0 %1202
      %v1204 = vsel %vm516, %v1181, -inf
      %1205 = vmax.xlane.f32.xlu0 %v1204
      %v1206 = vpop.xlane.xlu0 %1205
      %v1207 = vsel %vm516, %v1184, -inf
      %1208 = vmax.xlane.f32.xlu0 %v1207
      %v1209 = vpop.xlane.xlu0 %1208
      %v1210 = vsel %vm516, %v1187, -inf
      %1211 = vmax.xlane.f32.xlu0 %v1210
      %v1212 = vpop.xlane.xlu0 %1211
      %v1213 = vsel %vm516, %v1190, -inf
      %1214 = vmax.xlane.f32.xlu0 %v1213
      %v1215 = vpop.xlane.xlu0 %1214
      %v1216 = vsel %vm516, %v1193, -inf
      %1217 = vmax.xlane.f32.xlu0 %v1216
      %v1218 = vpop.xlane.xlu0 %1217
      %v1219 = vsel %vm516, %v1196, -inf
      %1220 = vmax.xlane.f32.xlu0 %v1219
      %v1221 = vpop.xlane.xlu0 %1220
      %v1222 = vsel %vm516, %v1199, -inf
      %1223 = vmax.xlane.f32.xlu0 %v1222
      %v1224 = vpop.xlane.xlu0 %1223
      %v1225 = vsub.f32 %v1178, %v1203
      %v1226 = vsub.f32 %v1181, %v1206
      %v1227 = vsub.f32 %v1184, %v1209
      %v1228 = vsub.f32 %v1187, %v1212
      %v1229 = vsub.f32 %v1190, %v1215
      %v1230 = vsub.f32 %v1193, %v1218
      %v1231 = vsub.f32 %v1196, %v1221
      %v1232 = vsub.f32 %v1199, %v1224
      %v1233 = vmul.f32 %v1225, 1.442695
      %v1234 = vpow.pop %v1233
      %v1235 = vmul.f32 %v1226, 1.442695
      %v1236 = vpow.pop %v1235
      %v1237 = vmul.f32 %v1227, 1.442695
      %v1238 = vpow.pop %v1237
      %v1239 = vmul.f32 %v1228, 1.442695
      %v1240 = vpow.pop %v1239
      %v1241 = vmul.f32 %v1229, 1.442695
      %v1242 = vpow.pop %v1241
      %v1243 = vmul.f32 %v1230, 1.442695
      %v1244 = vpow.pop %v1243
      %v1245 = vmul.f32 %v1231, 1.442695
      %v1246 = vpow.pop %v1245
      %v1247 = vmul.f32 %v1232, 1.442695
      %v1248 = vpow.pop %v1247
      %v1249 = vsel %vm516, %v1234, 0.0
      %1250 = vadd.xlane.f32.xlu0 %v1249
      %v1251 = vpop.xlane.xlu0 %1250
      %v1252 = vsel %vm516, %v1236, 0.0
      %1253 = vadd.xlane.f32.xlu0 %v1252
      %v1254 = vpop.xlane.xlu0 %1253
      %v1255 = vsel %vm516, %v1238, 0.0
      %1256 = vadd.xlane.f32.xlu0 %v1255
      %v1257 = vpop.xlane.xlu0 %1256
      %v1258 = vsel %vm516, %v1240, 0.0
      %1259 = vadd.xlane.f32.xlu0 %v1258
      %v1260 = vpop.xlane.xlu0 %1259
      %v1261 = vsel %vm516, %v1242, 0.0
      %1262 = vadd.xlane.f32.xlu0 %v1261
      %v1263 = vpop.xlane.xlu0 %1262
      %v1264 = vsel %vm516, %v1244, 0.0
      %1265 = vadd.xlane.f32.xlu0 %v1264
      %v1266 = vpop.xlane.xlu0 %1265
      %v1267 = vsel %vm516, %v1246, 0.0
      %1268 = vadd.xlane.f32.xlu0 %v1267
      %v1269 = vpop.xlane.xlu0 %1268
      %v1270 = vsel %vm516, %v1248, 0.0
      %1271 = vadd.xlane.f32.xlu0 %v1270
      %v1272 = vpop.xlane.xlu0 %1271
      %1273 = vrot.lane.b32.xlu0 %v442, 112
      %v1274 = vpop.permute.xlu0 %1273
      %1275 = vrot.lane.b32.xlu0 %v443, 112
      %v1276 = vpop.permute.xlu0 %1275
      %v1280 = vsel %vm516, %v1234, 0
      %v1283 = vsel %vm516, %v1236, 0
      %v1286 = vsel %vm516, %v1238, 0
      %v1289 = vsel %vm516, %v1240, 0
      %v1292 = vsel %vm516, %v1242, 0
      %v1295 = vsel %vm516, %v1244, 0
      %v1298 = vsel %vm516, %v1246, 0
      %v1301 = vsel %vm516, %v1248, 0
      %1303 = vmatpush.msra.mxu0 0.0
      %1304 = vmatpush.msra.mxu0 0.0
      %1305 = vmatpush.msra.mxu0 0.0
      %1306 = vmatpush.msra.mxu0 0.0
      %1307 = vmatpush.msra.mxu0 0.0
      %1308 = vmatpush.msra.mxu0 0.0
      %1309 = vmatpush.msra.mxu0 0.0
      %1310 = vmatpush.msra.mxu0 0.0
      %1311 = vmatpush.msra.mxu0 0.0
      %1312 = vmatpush.msra.mxu0 0.0
      %1313 = vmatpush.msra.mxu0 0.0
      %1314 = vmatpush.msra.mxu0 0.0
      %1315 = vmatpush.msra.mxu0 0.0
      %1316 = vmatpush.msra.mxu0 0.0
      %1317 = vmatpush.msra.mxu0 %v1276
      %1318 = vmatpush.msra.mxu0 %v1274
      %1319 = vmatmul.f32.gmra.mxu0 %v1280
      %v1320 = vpop.f32.mrf.mxu0
      %v1321 = vadd.f32 0.0, %v1320
      %1322 = vmatmul.f32.gmra.mxu0 %v1283
      %v1323 = vpop.f32.mrf.mxu0
      %v1324 = vadd.f32 0.0, %v1323
      %1325 = vmatmul.f32.gmra.mxu0 %v1286
      %v1326 = vpop.f32.mrf.mxu0
      %v1327 = vadd.f32 0.0, %v1326
      %1328 = vmatmul.f32.gmra.mxu0 %v1289
      %v1329 = vpop.f32.mrf.mxu0
      %v1330 = vadd.f32 0.0, %v1329
      %1331 = vmatmul.f32.gmra.mxu0 %v1292
      %v1332 = vpop.f32.mrf.mxu0
      %v1333 = vadd.f32 0.0, %v1332
      %1334 = vmatmul.f32.gmra.mxu0 %v1295
      %v1335 = vpop.f32.mrf.mxu0
      %v1336 = vadd.f32 0.0, %v1335
      %1337 = vmatmul.f32.gmra.mxu0 %v1298
      %v1338 = vpop.f32.mrf.mxu0
      %v1339 = vadd.f32 0.0, %v1338
      %1340 = vmatmul.f32.gmra.mxu0 %v1301
      %v1341 = vpop.f32.mrf.mxu0
      %v1342 = vadd.f32 0.0, %v1341
      %1343 = vdwg.mxu0
      %v1344 = vrcp.pop %v1251
      %v1345 = vmul.f32 %v1251, %v1344
      %v1346 = vsub.f32 1.0, %v1345
      %v1347 = vmul.f32 %v1344, %v1346
      %v1348 = vadd.f32 %v1344, %v1347
      %vm1349 = vweird.f32 %v1251
      %vm1350 = vweird.f32 %v1344
      %vm1351 = vmor %vm1349, %vm1350
      %v1352 = vsel %vm1351, %v1344, %v1348
      %v1353 = vand.u32 2147483647, %v1251
      %vm1354 = vcmp.eq.f32.partialorder %v1353, 8.507059e+37
      %v1355 = vand.u32 %v1251, 2147483648
      %v1356 = vor.u32 1.1754944e-38, %v1355
      %v1357 = vsel %vm1354, %v1356, %v1352
      %v1358 = vmul.f32 %v1321, %v1357
      %v1359 = vrcp.pop %v1254
      %v1360 = vmul.f32 %v1254, %v1359
      %v1361 = vsub.f32 1.0, %v1360
      %v1362 = vmul.f32 %v1359, %v1361
      %v1363 = vadd.f32 %v1359, %v1362
      %vm1364 = vweird.f32 %v1254
      %vm1365 = vweird.f32 %v1359
      %vm1366 = vmor %vm1364, %vm1365
      %v1367 = vsel %vm1366, %v1359, %v1363
      %v1368 = vand.u32 2147483647, %v1254
      %vm1369 = vcmp.eq.f32.partialorder %v1368, 8.507059e+37
      %v1370 = vand.u32 %v1254, 2147483648
      %v1371 = vor.u32 1.1754944e-38, %v1370
      %v1372 = vsel %vm1369, %v1371, %v1367
      %v1373 = vmul.f32 %v1324, %v1372
      %v1374 = vrcp.pop %v1257
      %v1375 = vmul.f32 %v1257, %v1374
      %v1376 = vsub.f32 1.0, %v1375
      %v1377 = vmul.f32 %v1374, %v1376
      %v1378 = vadd.f32 %v1374, %v1377
      %vm1379 = vweird.f32 %v1257
      %vm1380 = vweird.f32 %v1374
      %vm1381 = vmor %vm1379, %vm1380
      %v1382 = vsel %vm1381, %v1374, %v1378
      %v1383 = vand.u32 2147483647, %v1257
      %vm1384 = vcmp.eq.f32.partialorder %v1383, 8.507059e+37
      %v1385 = vand.u32 %v1257, 2147483648
      %v1386 = vor.u32 1.1754944e-38, %v1385
      %v1387 = vsel %vm1384, %v1386, %v1382
      %v1388 = vmul.f32 %v1327, %v1387
      %v1389 = vrcp.pop %v1260
      %v1390 = vmul.f32 %v1260, %v1389
      %v1391 = vsub.f32 1.0, %v1390
      %v1392 = vmul.f32 %v1389, %v1391
      %v1393 = vadd.f32 %v1389, %v1392
      %vm1394 = vweird.f32 %v1260
      %vm1395 = vweird.f32 %v1389
      %vm1396 = vmor %vm1394, %vm1395
      %v1397 = vsel %vm1396, %v1389, %v1393
      %v1398 = vand.u32 2147483647, %v1260
      %vm1399 = vcmp.eq.f32.partialorder %v1398, 8.507059e+37
      %v1400 = vand.u32 %v1260, 2147483648
      %v1401 = vor.u32 1.1754944e-38, %v1400
      %v1402 = vsel %vm1399, %v1401, %v1397
      %v1403 = vmul.f32 %v1330, %v1402
      %v1404 = vrcp.pop %v1263
      %v1405 = vmul.f32 %v1263, %v1404
      %v1406 = vsub.f32 1.0, %v1405
      %v1407 = vmul.f32 %v1404, %v1406
      %v1408 = vadd.f32 %v1404, %v1407
      %vm1409 = vweird.f32 %v1263
      %vm1410 = vweird.f32 %v1404
      %vm1411 = vmor %vm1409, %vm1410
      %v1412 = vsel %vm1411, %v1404, %v1408
      %v1413 = vand.u32 2147483647, %v1263
      %vm1414 = vcmp.eq.f32.partialorder %v1413, 8.507059e+37
      %v1415 = vand.u32 %v1263, 2147483648
      %v1416 = vor.u32 1.1754944e-38, %v1415
      %v1417 = vsel %vm1414, %v1416, %v1412
      %v1418 = vmul.f32 %v1333, %v1417
      %v1419 = vrcp.pop %v1266
      %v1420 = vmul.f32 %v1266, %v1419
      %v1421 = vsub.f32 1.0, %v1420
      %v1422 = vmul.f32 %v1419, %v1421
      %v1423 = vadd.f32 %v1419, %v1422
      %vm1424 = vweird.f32 %v1266
      %vm1425 = vweird.f32 %v1419
      %vm1426 = vmor %vm1424, %vm1425
      %v1427 = vsel %vm1426, %v1419, %v1423
      %v1428 = vand.u32 2147483647, %v1266
      %vm1429 = vcmp.eq.f32.partialorder %v1428, 8.507059e+37
      %v1430 = vand.u32 %v1266, 2147483648
      %v1431 = vor.u32 1.1754944e-38, %v1430
      %v1432 = vsel %vm1429, %v1431, %v1427
      %v1433 = vmul.f32 %v1336, %v1432
      %v1434 = vrcp.pop %v1269
      %v1435 = vmul.f32 %v1269, %v1434
      %v1436 = vsub.f32 1.0, %v1435
      %v1437 = vmul.f32 %v1434, %v1436
      %v1438 = vadd.f32 %v1434, %v1437
      %vm1439 = vweird.f32 %v1269
      %vm1440 = vweird.f32 %v1434
      %vm1441 = vmor %vm1439, %vm1440
      %v1442 = vsel %vm1441, %v1434, %v1438
      %v1443 = vand.u32 2147483647, %v1269
      %vm1444 = vcmp.eq.f32.partialorder %v1443, 8.507059e+37
      %v1445 = vand.u32 %v1269, 2147483648
      %v1446 = vor.u32 1.1754944e-38, %v1445
      %v1447 = vsel %vm1444, %v1446, %v1442
      %v1448 = vmul.f32 %v1339, %v1447
      %v1449 = vrcp.pop %v1272
      %v1450 = vmul.f32 %v1272, %v1449
      %v1451 = vsub.f32 1.0, %v1450
      %v1452 = vmul.f32 %v1449, %v1451
      %v1453 = vadd.f32 %v1449, %v1452
      %vm1454 = vweird.f32 %v1272
      %vm1455 = vweird.f32 %v1449
      %vm1456 = vmor %vm1454, %vm1455
      %v1457 = vsel %vm1456, %v1449, %v1453
      %v1458 = vand.u32 2147483647, %v1272
      %vm1459 = vcmp.eq.f32.partialorder %v1458, 8.507059e+37
      %v1460 = vand.u32 %v1272, 2147483648
      %v1461 = vor.u32 1.1754944e-38, %v1460
      %v1462 = vsel %vm1459, %v1461, %v1457
      %v1463 = vmul.f32 %v1342, %v1462
      %1464 = vrot.lane.b32.xlu0 %v417, 104
      %v1465 = vpop.permute.xlu0 %1464
      %1466 = vrot.lane.b32.xlu0 %v420, 104
      %v1467 = vpop.permute.xlu0 %1466
      %1468 = vrot.lane.b32.xlu0 %v423, 104
      %v1469 = vpop.permute.xlu0 %1468
      %1470 = vrot.lane.b32.xlu0 %v426, 104
      %v1471 = vpop.permute.xlu0 %1470
      %1472 = vrot.lane.b32.xlu0 %v429, 104
      %v1473 = vpop.permute.xlu0 %1472
      %1474 = vrot.lane.b32.xlu0 %v432, 104
      %v1475 = vpop.permute.xlu0 %1474
      %1476 = vrot.lane.b32.xlu0 %v435, 104
      %v1477 = vpop.permute.xlu0 %1476
      %1478 = vrot.lane.b32.xlu0 %v438, 104
      %v1479 = vpop.permute.xlu0 %1478
      %1480 = vrot.lane.b32.xlu0 %v440, 104
      %v1481 = vpop.permute.xlu0 %1480
      %1482 = vrot.lane.b32.xlu0 %v441, 104
      %v1483 = vpop.permute.xlu0 %1482
      %v1484 = vsel %vm444, %v1465, 0
      %v1486 = vsel %vm444, %v1467, 0
      %v1488 = vsel %vm444, %v1469, 0
      %v1490 = vsel %vm444, %v1471, 0
      %v1492 = vsel %vm444, %v1473, 0
      %v1494 = vsel %vm444, %v1475, 0
      %v1496 = vsel %vm444, %v1477, 0
      %v1498 = vsel %vm444, %v1479, 0
      %v1500 = vsel %vm444, %v1481, 0
      %v1502 = vsel %vm444, %v1483, 0
      %1504 = vmatpush.xpose.msra.mxu0 0.0
      %1505 = vmatpush.xpose.msra.mxu0 0.0
      %1506 = vmatpush.xpose.msra.mxu0 0.0
      %1507 = vmatpush.xpose.msra.mxu0 0.0
      %1508 = vmatpush.xpose.msra.mxu0 0.0
      %1509 = vmatpush.xpose.msra.mxu0 0.0
      %1510 = vmatpush.xpose.msra.mxu0 0.0
      %1511 = vmatpush.xpose.msra.mxu0 0.0
      %1512 = vmatpush.xpose.msra.mxu0 0.0
      %1513 = vmatpush.xpose.msra.mxu0 0.0
      %1514 = vmatpush.xpose.msra.mxu0 0.0
      %1515 = vmatpush.xpose.msra.mxu0 0.0
      %1516 = vmatpush.xpose.msra.mxu0 0.0
      %1517 = vmatpush.xpose.msra.mxu0 0.0
      %1518 = vmatpush.xpose.msra.mxu0 %v1502
      %1519 = vmatpush.xpose.msra.mxu0 %v1500
      %1520 = vmatmul.f32.gmra.mxu0 %v1484
      %v1521 = vpop.f32.mrf.mxu0
      %v1522 = vadd.f32 0.0, %v1521
      %1523 = vmatmul.f32.gmra.mxu0 %v1486
      %v1524 = vpop.f32.mrf.mxu0
      %v1525 = vadd.f32 0.0, %v1524
      %1526 = vmatmul.f32.gmra.mxu0 %v1488
      %v1527 = vpop.f32.mrf.mxu0
      %v1528 = vadd.f32 0.0, %v1527
      %1529 = vmatmul.f32.gmra.mxu0 %v1490
      %v1530 = vpop.f32.mrf.mxu0
      %v1531 = vadd.f32 0.0, %v1530
      %1532 = vmatmul.f32.gmra.mxu0 %v1492
      %v1533 = vpop.f32.mrf.mxu0
      %v1534 = vadd.f32 0.0, %v1533
      %1535 = vmatmul.f32.gmra.mxu0 %v1494
      %v1536 = vpop.f32.mrf.mxu0
      %v1537 = vadd.f32 0.0, %v1536
      %1538 = vmatmul.f32.gmra.mxu0 %v1496
      %v1539 = vpop.f32.mrf.mxu0
      %v1540 = vadd.f32 0.0, %v1539
      %1541 = vmatmul.f32.gmra.mxu0 %v1498
      %v1542 = vpop.f32.mrf.mxu0
      %v1543 = vadd.f32 0.0, %v1542
      %1544 = vdwg.mxu0
      %v1545 = vsel %vm516, %v1522, -inf
      %1546 = vmax.xlane.f32.xlu0 %v1545
      %v1547 = vpop.xlane.xlu0 %1546
      %v1548 = vsel %vm516, %v1525, -inf
      %1549 = vmax.xlane.f32.xlu0 %v1548
      %v1550 = vpop.xlane.xlu0 %1549
      %v1551 = vsel %vm516, %v1528, -inf
      %1552 = vmax.xlane.f32.xlu0 %v1551
      %v1553 = vpop.xlane.xlu0 %1552
      %v1554 = vsel %vm516, %v1531, -inf
      %1555 = vmax.xlane.f32.xlu0 %v1554
      %v1556 = vpop.xlane.xlu0 %1555
      %v1557 = vsel %vm516, %v1534, -inf
      %1558 = vmax.xlane.f32.xlu0 %v1557
      %v1559 = vpop.xlane.xlu0 %1558
      %v1560 = vsel %vm516, %v1537, -inf
      %1561 = vmax.xlane.f32.xlu0 %v1560
      %v1562 = vpop.xlane.xlu0 %1561
      %v1563 = vsel %vm516, %v1540, -inf
      %1564 = vmax.xlane.f32.xlu0 %v1563
      %v1565 = vpop.xlane.xlu0 %1564
      %v1566 = vsel %vm516, %v1543, -inf
      %1567 = vmax.xlane.f32.xlu0 %v1566
      %v1568 = vpop.xlane.xlu0 %1567
      %v1569 = vsub.f32 %v1522, %v1547
      %v1570 = vsub.f32 %v1525, %v1550
      %v1571 = vsub.f32 %v1528, %v1553
      %v1572 = vsub.f32 %v1531, %v1556
      %v1573 = vsub.f32 %v1534, %v1559
      %v1574 = vsub.f32 %v1537, %v1562
      %v1575 = vsub.f32 %v1540, %v1565
      %v1576 = vsub.f32 %v1543, %v1568
      %v1577 = vmul.f32 %v1569, 1.442695
      %v1578 = vpow.pop %v1577
      %v1579 = vmul.f32 %v1570, 1.442695
      %v1580 = vpow.pop %v1579
      %v1581 = vmul.f32 %v1571, 1.442695
      %v1582 = vpow.pop %v1581
      %v1583 = vmul.f32 %v1572, 1.442695
      %v1584 = vpow.pop %v1583
      %v1585 = vmul.f32 %v1573, 1.442695
      %v1586 = vpow.pop %v1585
      %v1587 = vmul.f32 %v1574, 1.442695
      %v1588 = vpow.pop %v1587
      %v1589 = vmul.f32 %v1575, 1.442695
      %v1590 = vpow.pop %v1589
      %v1591 = vmul.f32 %v1576, 1.442695
      %v1592 = vpow.pop %v1591
      %v1593 = vsel %vm516, %v1578, 0.0
      %1594 = vadd.xlane.f32.xlu0 %v1593
      %v1595 = vpop.xlane.xlu0 %1594
      %v1596 = vsel %vm516, %v1580, 0.0
      %1597 = vadd.xlane.f32.xlu0 %v1596
      %v1598 = vpop.xlane.xlu0 %1597
      %v1599 = vsel %vm516, %v1582, 0.0
      %1600 = vadd.xlane.f32.xlu0 %v1599
      %v1601 = vpop.xlane.xlu0 %1600
      %v1602 = vsel %vm516, %v1584, 0.0
      %1603 = vadd.xlane.f32.xlu0 %v1602
      %v1604 = vpop.xlane.xlu0 %1603
      %v1605 = vsel %vm516, %v1586, 0.0
      %1606 = vadd.xlane.f32.xlu0 %v1605
      %v1607 = vpop.xlane.xlu0 %1606
      %v1608 = vsel %vm516, %v1588, 0.0
      %1609 = vadd.xlane.f32.xlu0 %v1608
      %v1610 = vpop.xlane.xlu0 %1609
      %v1611 = vsel %vm516, %v1590, 0.0
      %1612 = vadd.xlane.f32.xlu0 %v1611
      %v1613 = vpop.xlane.xlu0 %1612
      %v1614 = vsel %vm516, %v1592, 0.0
      %1615 = vadd.xlane.f32.xlu0 %v1614
      %v1616 = vpop.xlane.xlu0 %1615
      %1617 = vrot.lane.b32.xlu0 %v442, 104
      %v1618 = vpop.permute.xlu0 %1617
      %1619 = vrot.lane.b32.xlu0 %v443, 104
      %v1620 = vpop.permute.xlu0 %1619
      %v1624 = vsel %vm516, %v1578, 0
      %v1627 = vsel %vm516, %v1580, 0
      %v1630 = vsel %vm516, %v1582, 0
      %v1633 = vsel %vm516, %v1584, 0
      %v1636 = vsel %vm516, %v1586, 0
      %v1639 = vsel %vm516, %v1588, 0
      %v1642 = vsel %vm516, %v1590, 0
      %v1645 = vsel %vm516, %v1592, 0
      %1647 = vmatpush.msra.mxu0 0.0
      %1648 = vmatpush.msra.mxu0 0.0
      %1649 = vmatpush.msra.mxu0 0.0
      %1650 = vmatpush.msra.mxu0 0.0
      %1651 = vmatpush.msra.mxu0 0.0
      %1652 = vmatpush.msra.mxu0 0.0
      %1653 = vmatpush.msra.mxu0 0.0
      %1654 = vmatpush.msra.mxu0 0.0
      %1655 = vmatpush.msra.mxu0 0.0
      %1656 = vmatpush.msra.mxu0 0.0
      %1657 = vmatpush.msra.mxu0 0.0
      %1658 = vmatpush.msra.mxu0 0.0
      %1659 = vmatpush.msra.mxu0 0.0
      %1660 = vmatpush.msra.mxu0 0.0
      %1661 = vmatpush.msra.mxu0 %v1620
      %1662 = vmatpush.msra.mxu0 %v1618
      %1663 = vmatmul.f32.gmra.mxu0 %v1624
      %v1664 = vpop.f32.mrf.mxu0
      %v1665 = vadd.f32 0.0, %v1664
      %1666 = vmatmul.f32.gmra.mxu0 %v1627
      %v1667 = vpop.f32.mrf.mxu0
      %v1668 = vadd.f32 0.0, %v1667
      %1669 = vmatmul.f32.gmra.mxu0 %v1630
      %v1670 = vpop.f32.mrf.mxu0
      %v1671 = vadd.f32 0.0, %v1670
      %1672 = vmatmul.f32.gmra.mxu0 %v1633
      %v1673 = vpop.f32.mrf.mxu0
      %v1674 = vadd.f32 0.0, %v1673
      %1675 = vmatmul.f32.gmra.mxu0 %v1636
      %v1676 = vpop.f32.mrf.mxu0
      %v1677 = vadd.f32 0.0, %v1676
      %1678 = vmatmul.f32.gmra.mxu0 %v1639
      %v1679 = vpop.f32.mrf.mxu0
      %v1680 = vadd.f32 0.0, %v1679
      %1681 = vmatmul.f32.gmra.mxu0 %v1642
      %v1682 = vpop.f32.mrf.mxu0
      %v1683 = vadd.f32 0.0, %v1682
      %1684 = vmatmul.f32.gmra.mxu0 %v1645
      %v1685 = vpop.f32.mrf.mxu0
      %v1686 = vadd.f32 0.0, %v1685
      %1687 = vdwg.mxu0
      %v1688 = vrcp.pop %v1595
      %v1689 = vmul.f32 %v1595, %v1688
      %v1690 = vsub.f32 1.0, %v1689
      %v1691 = vmul.f32 %v1688, %v1690
      %v1692 = vadd.f32 %v1688, %v1691
      %vm1693 = vweird.f32 %v1595
      %vm1694 = vweird.f32 %v1688
      %vm1695 = vmor %vm1693, %vm1694
      %v1696 = vsel %vm1695, %v1688, %v1692
      %v1697 = vand.u32 2147483647, %v1595
      %vm1698 = vcmp.eq.f32.partialorder %v1697, 8.507059e+37
      %v1699 = vand.u32 %v1595, 2147483648
      %v1700 = vor.u32 1.1754944e-38, %v1699
      %v1701 = vsel %vm1698, %v1700, %v1696
      %v1702 = vmul.f32 %v1665, %v1701
      %v1703 = vrcp.pop %v1598
      %v1704 = vmul.f32 %v1598, %v1703
      %v1705 = vsub.f32 1.0, %v1704
      %v1706 = vmul.f32 %v1703, %v1705
      %v1707 = vadd.f32 %v1703, %v1706
      %vm1708 = vweird.f32 %v1598
      %vm1709 = vweird.f32 %v1703
      %vm1710 = vmor %vm1708, %vm1709
      %v1711 = vsel %vm1710, %v1703, %v1707
      %v1712 = vand.u32 2147483647, %v1598
      %vm1713 = vcmp.eq.f32.partialorder %v1712, 8.507059e+37
      %v1714 = vand.u32 %v1598, 2147483648
      %v1715 = vor.u32 1.1754944e-38, %v1714
      %v1716 = vsel %vm1713, %v1715, %v1711
      %v1717 = vmul.f32 %v1668, %v1716
      %v1718 = vrcp.pop %v1601
      %v1719 = vmul.f32 %v1601, %v1718
      %v1720 = vsub.f32 1.0, %v1719
      %v1721 = vmul.f32 %v1718, %v1720
      %v1722 = vadd.f32 %v1718, %v1721
      %vm1723 = vweird.f32 %v1601
      %vm1724 = vweird.f32 %v1718
      %vm1725 = vmor %vm1723, %vm1724
      %v1726 = vsel %vm1725, %v1718, %v1722
      %v1727 = vand.u32 2147483647, %v1601
      %vm1728 = vcmp.eq.f32.partialorder %v1727, 8.507059e+37
      %v1729 = vand.u32 %v1601, 2147483648
      %v1730 = vor.u32 1.1754944e-38, %v1729
      %v1731 = vsel %vm1728, %v1730, %v1726
      %v1732 = vmul.f32 %v1671, %v1731
      %v1733 = vrcp.pop %v1604
      %v1734 = vmul.f32 %v1604, %v1733
      %v1735 = vsub.f32 1.0, %v1734
      %v1736 = vmul.f32 %v1733, %v1735
      %v1737 = vadd.f32 %v1733, %v1736
      %vm1738 = vweird.f32 %v1604
      %vm1739 = vweird.f32 %v1733
      %vm1740 = vmor %vm1738, %vm1739
      %v1741 = vsel %vm1740, %v1733, %v1737
      %v1742 = vand.u32 2147483647, %v1604
      %vm1743 = vcmp.eq.f32.partialorder %v1742, 8.507059e+37
      %v1744 = vand.u32 %v1604, 2147483648
      %v1745 = vor.u32 1.1754944e-38, %v1744
      %v1746 = vsel %vm1743, %v1745, %v1741
      %v1747 = vmul.f32 %v1674, %v1746
      %v1748 = vrcp.pop %v1607
      %v1749 = vmul.f32 %v1607, %v1748
      %v1750 = vsub.f32 1.0, %v1749
      %v1751 = vmul.f32 %v1748, %v1750
      %v1752 = vadd.f32 %v1748, %v1751
      %vm1753 = vweird.f32 %v1607
      %vm1754 = vweird.f32 %v1748
      %vm1755 = vmor %vm1753, %vm1754
      %v1756 = vsel %vm1755, %v1748, %v1752
      %v1757 = vand.u32 2147483647, %v1607
      %vm1758 = vcmp.eq.f32.partialorder %v1757, 8.507059e+37
      %v1759 = vand.u32 %v1607, 2147483648
      %v1760 = vor.u32 1.1754944e-38, %v1759
      %v1761 = vsel %vm1758, %v1760, %v1756
      %v1762 = vmul.f32 %v1677, %v1761
      %v1763 = vrcp.pop %v1610
      %v1764 = vmul.f32 %v1610, %v1763
      %v1765 = vsub.f32 1.0, %v1764
      %v1766 = vmul.f32 %v1763, %v1765
      %v1767 = vadd.f32 %v1763, %v1766
      %vm1768 = vweird.f32 %v1610
      %vm1769 = vweird.f32 %v1763
      %vm1770 = vmor %vm1768, %vm1769
      %v1771 = vsel %vm1770, %v1763, %v1767
      %v1772 = vand.u32 2147483647, %v1610
      %vm1773 = vcmp.eq.f32.partialorder %v1772, 8.507059e+37
      %v1774 = vand.u32 %v1610, 2147483648
      %v1775 = vor.u32 1.1754944e-38, %v1774
      %v1776 = vsel %vm1773, %v1775, %v1771
      %v1777 = vmul.f32 %v1680, %v1776
      %v1778 = vrcp.pop %v1613
      %v1779 = vmul.f32 %v1613, %v1778
      %v1780 = vsub.f32 1.0, %v1779
      %v1781 = vmul.f32 %v1778, %v1780
      %v1782 = vadd.f32 %v1778, %v1781
      %vm1783 = vweird.f32 %v1613
      %vm1784 = vweird.f32 %v1778
      %vm1785 = vmor %vm1783, %vm1784
      %v1786 = vsel %vm1785, %v1778, %v1782
      %v1787 = vand.u32 2147483647, %v1613
      %vm1788 = vcmp.eq.f32.partialorder %v1787, 8.507059e+37
      %v1789 = vand.u32 %v1613, 2147483648
      %v1790 = vor.u32 1.1754944e-38, %v1789
      %v1791 = vsel %vm1788, %v1790, %v1786
      %v1792 = vmul.f32 %v1683, %v1791
      %v1793 = vrcp.pop %v1616
      %v1794 = vmul.f32 %v1616, %v1793
      %v1795 = vsub.f32 1.0, %v1794
      %v1796 = vmul.f32 %v1793, %v1795
      %v1797 = vadd.f32 %v1793, %v1796
      %vm1798 = vweird.f32 %v1616
      %vm1799 = vweird.f32 %v1793
      %vm1800 = vmor %vm1798, %vm1799
      %v1801 = vsel %vm1800, %v1793, %v1797
      %v1802 = vand.u32 2147483647, %v1616
      %vm1803 = vcmp.eq.f32.partialorder %v1802, 8.507059e+37
      %v1804 = vand.u32 %v1616, 2147483648
      %v1805 = vor.u32 1.1754944e-38, %v1804
      %v1806 = vsel %vm1803, %v1805, %v1801
      %v1807 = vmul.f32 %v1686, %v1806
      %1816 = vrot.lane.b32.xlu0 %v1014, 8
      %v1817 = vpop.permute.xlu0 %1816
      %1818 = vrot.lane.b32.xlu0 %v1029, 8
      %v1819 = vpop.permute.xlu0 %1818
      %1820 = vrot.lane.b32.xlu0 %v1044, 8
      %v1821 = vpop.permute.xlu0 %1820
      %1822 = vrot.lane.b32.xlu0 %v1059, 8
      %v1823 = vpop.permute.xlu0 %1822
      %1824 = vrot.lane.b32.xlu0 %v1074, 8
      %v1825 = vpop.permute.xlu0 %1824
      %1826 = vrot.lane.b32.xlu0 %v1089, 8
      %v1827 = vpop.permute.xlu0 %1826
      %1828 = vrot.lane.b32.xlu0 %v1104, 8
      %v1829 = vpop.permute.xlu0 %1828
      %1830 = vrot.lane.b32.xlu0 %v1119, 8
      %v1831 = vpop.permute.xlu0 %1830
      %1848 = vrot.lane.b32.xlu0 %v1358, 16
      %v1849 = vpop.permute.xlu0 %1848
      %1850 = vrot.lane.b32.xlu0 %v1373, 16
      %v1851 = vpop.permute.xlu0 %1850
      %1852 = vrot.lane.b32.xlu0 %v1388, 16
      %v1853 = vpop.permute.xlu0 %1852
      %1854 = vrot.lane.b32.xlu0 %v1403, 16
      %v1855 = vpop.permute.xlu0 %1854
      %1856 = vrot.lane.b32.xlu0 %v1418, 16
      %v1857 = vpop.permute.xlu0 %1856
      %1858 = vrot.lane.b32.xlu0 %v1433, 16
      %v1859 = vpop.permute.xlu0 %1858
      %1860 = vrot.lane.b32.xlu0 %v1448, 16
      %v1861 = vpop.permute.xlu0 %1860
      %1862 = vrot.lane.b32.xlu0 %v1463, 16
      %v1863 = vpop.permute.xlu0 %1862
      %1880 = vrot.lane.b32.xlu0 %v1702, 24
      %v1881 = vpop.permute.xlu0 %1880
      %1882 = vrot.lane.b32.xlu0 %v1717, 24
      %v1883 = vpop.permute.xlu0 %1882
      %1884 = vrot.lane.b32.xlu0 %v1732, 24
      %v1885 = vpop.permute.xlu0 %1884
      %1886 = vrot.lane.b32.xlu0 %v1747, 24
      %v1887 = vpop.permute.xlu0 %1886
      %1888 = vrot.lane.b32.xlu0 %v1762, 24
      %v1889 = vpop.permute.xlu0 %1888
      %1890 = vrot.lane.b32.xlu0 %v1777, 24
      %v1891 = vpop.permute.xlu0 %1890
      %1892 = vrot.lane.b32.xlu0 %v1792, 24
      %v1893 = vpop.permute.xlu0 %1892
      %1894 = vrot.lane.b32.xlu0 %v1807, 24
      %v1895 = vpop.permute.xlu0 %1894
      %v1904 = vsel %vm444, %v668, %v1817
      %v1905 = vsel %vm444, %v683, %v1819
      %v1906 = vsel %vm444, %v698, %v1821
      %v1907 = vsel %vm444, %v713, %v1823
      %v1908 = vsel %vm444, %v728, %v1825
      %v1909 = vsel %vm444, %v743, %v1827
      %v1910 = vsel %vm444, %v758, %v1829
      %v1911 = vsel %vm444, %v773, %v1831
      %v1912 = vsel %vm516, %v1904, %v1849
      %v1913 = vsel %vm516, %v1905, %v1851
      %v1914 = vsel %vm516, %v1906, %v1853
      %v1915 = vsel %vm516, %v1907, %v1855
      %v1916 = vsel %vm516, %v1908, %v1857
      %v1917 = vsel %vm516, %v1909, %v1859
      %v1918 = vsel %vm516, %v1910, %v1861
      %v1919 = vsel %vm516, %v1911, %v1863
      %vm1920 = vcmask 195584
      %v1921 = vsel %vm1920, %v1912, %v1881
      %v1922 = vsel %vm1920, %v1913, %v1883
      %v1923 = vsel %vm1920, %v1914, %v1885
      %v1924 = vsel %vm1920, %v1915, %v1887
      %v1925 = vsel %vm1920, %v1916, %v1889
      %v1926 = vsel %vm1920, %v1917, %v1891
      %v1927 = vsel %vm1920, %v1918, %v1893
      %v1928 = vsel %vm1920, %v1919, %v1895
      %v1929 = vld [vmem:[%s5] sm:$0xff]
      %v1930 = vld [vmem:[%s5 + $0x8] sm:$0xff]
      %v1931 = vld [vmem:[%s5 + $0x10] sm:$0xff]
      %v1932 = vld [vmem:[%s5 + $0x18] sm:$0xff]
      %v1933 = vld [vmem:[%s6] sm:$0x1]
      %v1935 = vperm.slane %v1933, 0
      %v1938 = vsel %vm374, %v1921, 0
      %v1941 = vsel %vm374, %v1922, 0
      %v1944 = vsel %vm374, %v1923, 0
      %v1947 = vsel %vm374, %v1924, 0
      %v1950 = vsel %vm374, %v1925, 0
      %v1953 = vsel %vm374, %v1926, 0
      %v1956 = vsel %vm374, %v1927, 0
      %v1959 = vsel %vm374, %v1928, 0
      %1961 = vmatpush.msra.mxu0 0.0
      %1962 = vmatpush.msra.mxu0 0.0
      %1963 = vmatpush.msra.mxu0 0.0
      %1964 = vmatpush.msra.mxu0 0.0
      %1965 = vmatpush.msra.mxu0 0.0
      %1966 = vmatpush.msra.mxu0 0.0
      %1967 = vmatpush.msra.mxu0 0.0
      %1968 = vmatpush.msra.mxu0 0.0
      %1969 = vmatpush.msra.mxu0 0.0
      %1970 = vmatpush.msra.mxu0 0.0
      %1971 = vmatpush.msra.mxu0 0.0
      %1972 = vmatpush.msra.mxu0 0.0
      %1973 = vmatpush.msra.mxu0 %v1932
      %1974 = vmatpush.msra.mxu0 %v1931
      %1975 = vmatpush.msra.mxu0 %v1930
      %1976 = vmatpush.msra.mxu0 %v1929
      %1977 = vmatmul.f32.gmra.mxu0 %v1938
      %v1978 = vpop.f32.mrf.mxu0
      %v1979 = vadd.f32 %v1935, %v1978
      %1980 = vmatmul.f32.gmra.mxu0 %v1941
      %v1981 = vpop.f32.mrf.mxu0
      %v1982 = vadd.f32 %v1935, %v1981
      %1983 = vmatmul.f32.gmra.mxu0 %v1944
      %v1984 = vpop.f32.mrf.mxu0
      %v1985 = vadd.f32 %v1935, %v1984
      %1986 = vmatmul.f32.gmra.mxu0 %v1947
      %v1987 = vpop.f32.mrf.mxu0
      %v1988 = vadd.f32 %v1935, %v1987
      %1989 = vmatmul.f32.gmra.mxu0 %v1950
      %v1990 = vpop.f32.mrf.mxu0
      %v1991 = vadd.f32 %v1935, %v1990
      %1992 = vmatmul.f32.gmra.mxu0 %v1953
      %v1993 = vpop.f32.mrf.mxu0
      %v1994 = vadd.f32 %v1935, %v1993
      %1995 = vmatmul.f32.gmra.mxu0 %v1956
      %v1996 = vpop.f32.mrf.mxu0
      %v1997 = vadd.f32 %v1935, %v1996
      %1998 = vmatmul.f32.gmra.mxu0 %v1959
      %v1999 = vpop.f32.mrf.mxu0
      %v2000 = vadd.f32 %v1935, %v1999
      %2001 = vdwg.mxu0
      %2002 = vst.msk [vmem:[%s356] sm:$0xff] %vm374, %v1979
      %2003 = vst.msk [vmem:[%s356 + $0x8] sm:$0xff] %vm374, %v1982
      %2004 = vst.msk [vmem:[%s356 + $0x10] sm:$0xff] %vm374, %v1985
      %2005 = vst.msk [vmem:[%s356 + $0x18] sm:$0xff] %vm374, %v1988
      %2006 = vst.msk [vmem:[%s356 + $0x20] sm:$0xff] %vm374, %v1991
      %2007 = vst.msk [vmem:[%s356 + $0x28] sm:$0xff] %vm374, %v1994
      %2008 = vst.msk [vmem:[%s356 + $0x30] sm:$0xff] %vm374, %v1997
      %2009 = vst.msk [vmem:[%s356 + $0x38] sm:$0xff] %vm374, %v2000
      %s2010 = smul.u32 8, %s23
      %p2011 = scmp.lt.s32.totalorder %s22, 1
      %s2012 = scalar_select %p2011, %s22, 1
      %p2013 = scmp.lt.s32.totalorder %s2010, 7
      %s2014 = scalar_select %p2013, %s2010, 7
      %s2015 = smul.addr %s2012, 8
      %s2016 = sadd.s32 %s2014, %s2015
      %s2017 = smul.addr %s2016, 8
      %s2018 = scalar_lea.vmem %s7, %s2017
      // Predicated region
      $region49: #{segformer_attention.3} parent=47 // pred_check
        %p2019 = pneg %p214
      $region50: #{segformer_attention.3} parent=47 // pred_check_branch
        %2021 = sbr.rel (%p2019) target = $region52
      $region51: #{segformer_attention.3} parent=47 // pred_region
        %s2022 = smul.u32 8, %s23
      $region52: #{segformer_attention.3} parent=47 // pred_fallthru
        _
    $region48: #{segformer_attention.3} parent=5 // pred_fallthru
      _
    %p2023 = scmp.le.s32.totalorder 2, %s13
    // Predicated region
    $region53: #{segformer_attention.3} parent=5 // pred_check
      %p2024 = pneg %p2023
    $region54: #{segformer_attention.3} parent=5 // pred_check_branch
      %2026 = sbr.rel (%p2024) target = $region56
    $region55: #{segformer_attention.3} parent=5 // pred_region
      %s2027 = ssub.s32 %s13, 2
      // Predicated region
      $region57: #{segformer_attention.3} parent=55 // pred_check
        %p2028 = pneg %p220
      $region58: #{segformer_attention.3} parent=55 // pred_check_branch
        %2030 = sbr.rel (%p2028) target = $region60
      $region59: #{segformer_attention.3} parent=55 // pred_region
        %s2031 = smul.u32 8, %s25
        %p2032 = scmp.lt.s32.totalorder %s24, 1
        %s2033 = scalar_select %p2032, %s24, 1
        %p2034 = scmp.lt.s32.totalorder %s2031, 7
        %s2035 = scalar_select %p2034, %s2031, 7
        %s2036 = smul.addr %s2033, 8
        %s2037 = sadd.s32 %s2035, %s2036
        %s2038 = smul.addr %s2037, 8
        %s2039 = scalar_lea.vmem %s7, %s2038
      $region60: #{segformer_attention.3} parent=55 // pred_fallthru
        _
    $region56: #{segformer_attention.3} parent=5 // pred_fallthru
      _
  $region6: #{segformer_attention.3} parent=0 // loop_footer
    %s17 = sadd.s32 1, %s13
  $region7: #{segformer_attention.3} parent=0 // loop_footer_branch
    %12 = sbr.rel target = $region3
  $region8: #{segformer_attention.3} parent=0 // loop_exit
    _

</llo_original>
